<compile_context>
chip_gen: v7x
topology: tpu7x:2x2x1
jax: 0.10.0
libtpu: 0.0.40
codegen_flags: <defaults>
</compile_context>

<pallas_src>
import functools

import numpy as np
import jax
import jax.numpy as jnp
from jax import lax
from jax.experimental import pallas as pl
from jax.experimental.pallas import tpu as pltpu


# ----------------------------------------------------------------------------
# Host-side parameter folding (all O(W^2 * C^2); independent of D*H*W volume)
# ----------------------------------------------------------------------------
def _interp_matrix_1d(n):
    """1-D linear interpolation matrix (2n, n): scale=2, align_corners=True."""
    out_n = 2 * n
    j = np.arange(out_n)
    src = j * (n - 1) / (out_n - 1)
    lo = np.clip(np.floor(src).astype(np.int64), 0, n - 1)
    hi = np.minimum(lo + 1, n - 1)
    w_hi = (src - lo).astype(np.float32)
    w_lo = (1.0 - w_hi).astype(np.float32)
    M = np.zeros((out_n, n), np.float32)
    M[j, lo] += w_lo
    M[j, hi] += w_hi
    return M


def _interp_plan(n):
    """Per-output (lo, hi, w_lo, w_hi) 2-tap blend plan (scale=2, align_corners)."""
    out_n = 2 * n
    plan = []
    for j in range(out_n):
        src = j * (n - 1) / (out_n - 1)
        lo = min(int(np.floor(src)), n - 1)
        hi = min(lo + 1, n - 1)
        wh = float(src - lo)
        plan.append((lo, hi, 1.0 - wh, wh))
    return tuple(plan)


def _conv_band_matrices(w_dhwio, W):
    """Fold the kw tap + SAME zero padding along W into 9 banded matrices.

    Returns A with shape (9, W*Cin, W*Cout) such that for tap t = kd*3 + kh,
      out[(d,h), w*Cout+co] += sum_j x[(d+kd-1, h+kh-1), j] * A[t, j, w*Cout+co]
    reproduces the 3x3x3 'SAME' cross-correlation restricted to that (kd, kh).
    """
    kD, kH, kW, Cin, Cout = w_dhwio.shape
    A = np.zeros((kD * kH, W * Cin, W * Cout), np.float32)
    for kd in range(kD):
        for kh in range(kH):
            t = kd * kH + kh
            for kw in range(kW):
                for w in range(W):
                    wi = w + kw - 1
                    if 0 <= wi < W:
                        A[t, wi * Cin:(wi + 1) * Cin, w * Cout:(w + 1) * Cout] = \
                            w_dhwio[kd, kh, kw]
    return A


def _fold_bn(bias, gamma, beta, mean, var, eps=1e-5):
    scale = gamma / jnp.sqrt(var + eps)
    shift = (bias - mean) * scale + beta
    return scale, shift


# ----------------------------------------------------------------------------
# Pallas kernels
# ----------------------------------------------------------------------------
def _upsample_kernel(x_ref, b_ref, bias_ref, o_ref, *, dplan, hplan):
    """Fused 1x1x1 conv + separable trilinear 2x upsample (per batch).

    x_ref:   (1, D1, H1, W1*C1)
    b_ref:   (W1*C1, 2*W1*C2)   kron(W-interp, 1x1 conv) matrix
    bias_ref:(1, 2*W1*C2)       conv bias tiled over output W
    o_ref:   (1, 2*D1, 2*H1, 2*W1*C2)
    """
    x = x_ref[0]                                      # (D1, H1, WC1)
    D1, H1, WC1 = x.shape
    WC2 = b_ref.shape[1]

    # 1x1 conv + W-axis interp as one matmul on the small (pre-upsample) grid.
    y = jnp.dot(x.reshape(D1 * H1, WC1), b_ref[...],
                preferred_element_type=jnp.float32) + bias_ref[...]
    y = y.reshape(D1, H1, WC2)

    # D-axis: 2-tap blends with host-known neighbors/weights (exploits scale=2).
    y = jnp.concatenate(
        [(wl * y[lo] + wh * y[hi])[None] for lo, hi, wl, wh in dplan], axis=0)
    # H-axis: same trick along axis 1.
    y = jnp.concatenate(
        [(wl * y[:, lo, :] + wh * y[:, hi, :])[:, None, :]
         for lo, hi, wl, wh in hplan], axis=1)

    o_ref[...] = y[None].astype(o_ref.dtype)


def _conv_accumulate(lo_ref, c_ref, hi_ref, w_ref, first, last):
    """Accumulate a 3x3x3 'SAME' conv for one input (banded-matrix form)."""
    _, tD, H, WCin = c_ref.shape
    WCout = w_ref.shape[-1]

    # D halo rows (zeroed at the volume boundary), H zero-pad done in VMEM.
    lo = lo_ref[0] * jnp.where(first, 0.0, 1.0)
    hi = hi_ref[0] * jnp.where(last, 0.0, 1.0)
    xd = jnp.concatenate([lo, c_ref[0], hi], axis=0)             # (tD+2, H, WCin)
    zrow = jnp.zeros((tD + 2, 1, WCin), xd.dtype)
    xp = jnp.concatenate([zrow, xd, zrow], axis=1)               # (tD+2, H+2, WCin)

    acc = jnp.zeros((tD * H, WCout), jnp.float32)
    for t in range(9):                                           # taps (kd, kh)
        kd, kh = t // 3, t % 3
        sl = xp[kd:kd + tD, kh:kh + H, :].reshape(tD * H, WCin)
        acc = acc + jnp.dot(sl, w_ref[t], preferred_element_type=jnp.float32)
    return acc


def _finalize(acc, scale_ref, shift_ref, o_ref, neg_slope):
    y = acc * scale_ref[...] + shift_ref[...]                    # folded BN (eval)
    y = jnp.where(y > 0, y, neg_slope * y)                       # LeakyReLU(0.01)
    o_ref[...] = y.reshape(o_ref.shape).astype(o_ref.dtype)


def _conv_bn_lrelu_kernel_1(lo, c, hi, w, scale, shift, o_ref, *, neg_slope):
    first = pl.program_id(1) == 0
    last = pl.program_id(1) == pl.num_programs(1) - 1
    acc = _conv_accumulate(lo, c, hi, w, first, last)
    _finalize(acc, scale, shift, o_ref, neg_slope)


def _conv_bn_lrelu_kernel_2(lo1, c1, hi1, lo2, c2, hi2, w1, w2,
                            scale, shift, o_ref, *, neg_slope):
    first = pl.program_id(1) == 0
    last = pl.program_id(1) == pl.num_programs(1) - 1
    acc = _conv_accumulate(lo1, c1, hi1, w1, first, last)
    acc = acc + _conv_accumulate(lo2, c2, hi2, w2, first, last)  # fused concat
    _finalize(acc, scale, shift, o_ref, neg_slope)


# ----------------------------------------------------------------------------
# pallas_call wrappers
# ----------------------------------------------------------------------------
def conv1x1_upsample(x1r, b_mat, bias_t, dplan, hplan):
    """x1r: (N, D1, H1, W1*C1) -> (N, 2D1, 2H1, 2W1*C2)."""
    N, D1, H1, WC1 = x1r.shape
    WC2 = b_mat.shape[1]
    D2, H2 = 2 * D1, 2 * H1
    kern = functools.partial(_upsample_kernel, dplan=dplan, hplan=hplan)
    return pl.pallas_call(
        kern,
        out_shape=jax.ShapeDtypeStruct((N, D2, H2, WC2), jnp.float32),
        grid=(N,),
        in_specs=[
            pl.BlockSpec((1, D1, H1, WC1), lambda n: (n, 0, 0, 0)),
            pl.BlockSpec(b_mat.shape, lambda n: (0, 0)),
            pl.BlockSpec((1, WC2), lambda n: (0, 0)),
        ],
        out_specs=pl.BlockSpec((1, D2, H2, WC2), lambda n: (n, 0, 0, 0)),
        compiler_params=pltpu.CompilerParams(dimension_semantics=("parallel",)),
    )(x1r, b_mat, bias_t)


def conv3d_bn_lrelu(xs, wbands, scale_t, shift_t, *, neg_slope=0.01):
    """Fused 3x3x3 'SAME' conv (+ folded BN + LeakyReLU) over 1 or 2 inputs.

    xs:      list of (N, D, H, W*Cin_i) activations (implicit channel concat).
    wbands:  list of (9, W*Cin_i, W*Cout) banded tap matrices.
    scale_t, shift_t: (1, W*Cout) channel-tiled BN scale / shift.
    Returns (N, D, H, W*Cout).
    """
    N, D, H, _ = xs[0].shape
    WCout = wbands[0].shape[-1]
    tD = 8 if D % 8 == 0 else D              # spatial (depth) tile
    nD = D // tD

    in_specs, operands = [], []
    for x in xs:
        WCin = x.shape[-1]
        in_specs += [
            # halo row below the tile (clamped; zeroed in-kernel at the edge)
            pl.BlockSpec((1, 1, H, WCin),
                         lambda n, i: (n, jnp.maximum(i * tD - 1, 0), 0, 0)),
            # center tile
            pl.BlockSpec((1, tD, H, WCin), lambda n, i: (n, i, 0, 0)),
            # halo row above the tile
            pl.BlockSpec((1, 1, H, WCin),
                         lambda n, i: (n, jnp.minimum(i * tD + tD, D - 1), 0, 0)),
        ]
        operands += [x, x, x]
    for wb in wbands:
        in_specs.append(pl.BlockSpec(wb.shape, lambda n, i: (0, 0, 0)))
        operands.append(wb)
    in_specs += [pl.BlockSpec((1, WCout), lambda n, i: (0, 0)),
                 pl.BlockSpec((1, WCout), lambda n, i: (0, 0))]
    operands += [scale_t, shift_t]

    kern = _conv_bn_lrelu_kernel_2 if len(xs) == 2 else _conv_bn_lrelu_kernel_1
    kern = functools.partial(kern, neg_slope=neg_slope)
    return pl.pallas_call(
        kern,
        out_shape=jax.ShapeDtypeStruct((N, D, H, WCout), jnp.float32),
        grid=(N, nD),
        in_specs=in_specs,
        out_specs=pl.BlockSpec((1, tD, H, WCout), lambda n, i: (n, i, 0, 0)),
        compiler_params=pltpu.CompilerParams(
            dimension_semantics=("parallel", "parallel")),
    )(*operands)


# ----------------------------------------------------------------------------
# Parameter construction / forward
# ----------------------------------------------------------------------------
def init_upblock_params(key, c1, c2, c_out):
    ks = jax.random.split(key, 12)
    raw = {}
    raw["w1x1"] = 0.2 * jax.random.normal(ks[0], (c1, c2), jnp.float32)
    raw["b1x1"] = 0.1 * jax.random.normal(ks[1], (c2,), jnp.float32)
    raw["wa"] = 0.1 * jax.random.normal(ks[2], (3, 3, 3, 2 * c2, c_out), jnp.float32)
    ba = 0.1 * jax.random.normal(ks[3], (c_out,), jnp.float32)
    ga = 1.0 + 0.1 * jax.random.normal(ks[4], (c_out,), jnp.float32)
    be = 0.1 * jax.random.normal(ks[5], (c_out,), jnp.float32)
    mu = 0.1 * jax.random.normal(ks[6], (c_out,), jnp.float32)
    va = 1.0 + 0.5 * jax.random.uniform(ks[7], (c_out,), jnp.float32)
    raw["scale_a"], raw["shift_a"] = _fold_bn(ba, ga, be, mu, va)
    raw["wb"] = 0.1 * jax.random.normal(ks[8], (3, 3, 3, c_out, c_out), jnp.float32)
    bb = 0.1 * jax.random.normal(ks[9], (c_out,), jnp.float32)
    gb = 1.0 + 0.1 * jax.random.normal(ks[10], (c_out,), jnp.float32)
    bt = 0.1 * jax.random.normal(ks[11], (c_out,), jnp.float32)
    mb = jnp.full((c_out,), 0.05, jnp.float32)
    vb = jnp.full((c_out,), 1.2, jnp.float32)
    raw["scale_b"], raw["shift_b"] = _fold_bn(bb, gb, bt, mb, vb)
    return raw


def prepare_upblock_operands(raw, d1, h1, w1):
    """Fold weights into the kernel-friendly operands (done once, host side)."""
    c1, c2 = raw["w1x1"].shape
    w2 = 2 * w1
    ops = {}
    # Fused (W-axis interp  (x)  1x1 conv) matrix: (W1*C1, 2*W1*C2).
    MW = _interp_matrix_1d(w1)
    w1x1 = np.asarray(raw["w1x1"])
    ops["b_upw"] = jnp.asarray(
        np.einsum("ow,ic->wioc", MW, w1x1).reshape(w1 * c1, w2 * c2))
    ops["bias_up"] = jnp.asarray(np.tile(np.asarray(raw["b1x1"]), w2)[None])
    ops["dplan"] = _interp_plan(d1)
    ops["hplan"] = _interp_plan(h1)
    # Banded conv tap matrices; conv-a weight split over the (x2 | up) channels.
    wa = np.asarray(raw["wa"])
    ops["band_a_x2"] = jnp.asarray(_conv_band_matrices(wa[..., :c2, :], w2))
    ops["band_a_up"] = jnp.asarray(_conv_band_matrices(wa[..., c2:, :], w2))
    ops["band_b"] = jnp.asarray(_conv_band_matrices(np.asarray(raw["wb"]), w2))
    # BN scale/shift tiled over W to match the (w, c) lane layout.
    ops["scale_a_t"] = jnp.asarray(np.tile(np.asarray(raw["scale_a"]), w2)[None])
    ops["shift_a_t"] = jnp.asarray(np.tile(np.asarray(raw["shift_a"]), w2)[None])
    ops["scale_b_t"] = jnp.asarray(np.tile(np.asarray(raw["scale_b"]), w2)[None])
    ops["shift_b_t"] = jnp.asarray(np.tile(np.asarray(raw["shift_b"]), w2)[None])
    ops["c_out"] = int(raw["wa"].shape[-1])
    return ops


def upblock_forward(ops, x1, x2):
    """x1: (N, D1, H1, W1, C1) high-level feats; x2: (N, 2D1, 2H1, 2W1, C2)."""
    N, D1, H1, W1, C1 = x1.shape
    _, D2, H2, W2, C2 = x2.shape
    # Free (contiguity-preserving) reshapes to the lane-dense (N, D, H, W*C) form.
    x1r = x1.reshape(N, D1, H1, W1 * C1)
    x2r = x2.reshape(N, D2, H2, W2 * C2)

    up = conv1x1_upsample(x1r, ops["b_upw"], ops["bias_up"],
                          ops["dplan"], ops["hplan"])
    # ConvBlock conv1 on the (x2 | up) channel concat, fused (no materialized cat).
    h = conv3d_bn_lrelu([x2r, up], [ops["band_a_x2"], ops["band_a_up"]],
                        ops["scale_a_t"], ops["shift_a_t"])
    # TODO(synk): Dropout is identity (eval mode).
    out = conv3d_bn_lrelu([h], [ops["band_b"]],
                          ops["scale_b_t"], ops["shift_b_t"])
    return out.reshape(N, D2, H2, W2, ops["c_out"])


# ----------------------------------------------------------------------------
# Pure-JAX reference (PyTorch semantics) for verification
# ----------------------------------------------------------------------------
def upblock_reference(raw, x1, x2):
    N, D1, H1, W1, C1 = x1.shape
    y = jnp.einsum("ndhwc,co->ndhwo", x1, raw["w1x1"]) + raw["b1x1"]
    MD = jnp.asarray(_interp_matrix_1d(D1))
    MH = jnp.asarray(_interp_matrix_1d(H1))
    MW = jnp.asarray(_interp_matrix_1d(W1))
    y = jnp.einsum("ad,ndhwc->nahwc", MD, y)
    y = jnp.einsum("bh,nahwc->nabwc", MH, y)
    y = jnp.einsum("gw,nabwc->nabgc", MW, y)
    x = jnp.concatenate([x2, y], axis=-1)

    def conv_bn(x, w, scale, shift):
        z = lax.conv_general_dilated(x, w, (1, 1, 1), "SAME",
                                     dimension_numbers=("NDHWC", "DHWIO", "NDHWC"))
        z = z * scale + shift
        return jnp.where(z > 0, z, 0.01 * z)

    h = conv_bn(x, raw["wa"], raw["scale_a"], raw["shift_a"])
    return conv_bn(h, raw["wb"], raw["scale_b"], raw["shift_b"])


# ----------------------------------------------------------------------------
if __name__ == "__main__":
    # UpBlock(in_channels1=8, in_channels2=4, out_channels=4, dropout_p=0.0)
    C1, C2, COUT = 8, 4, 4
    N, D1 = 2, 8                       # x1 spatial 8^3 ; x2 spatial 16^3
    H1 = W1 = D1

    key = jax.random.PRNGKey(0)
    k_x1, k_x2, k_p = jax.random.split(key, 3)
    x1 = jax.random.normal(k_x1, (N, D1, H1, W1, C1), jnp.float32)          # NDHWC
    x2 = jax.random.normal(k_x2, (N, 2 * D1, 2 * H1, 2 * W1, C2), jnp.float32)

    raw = init_upblock_params(k_p, C1, C2, COUT)
    ops = prepare_upblock_operands(raw, D1, H1, W1)

    out = jax.block_until_ready(upblock_forward(ops, x1, x2))
    assert out.shape == (N, 2 * D1, 2 * H1, 2 * W1, COUT), out.shape

    ref = jax.block_until_ready(upblock_reference(raw, x1, x2))
    np.testing.assert_allclose(np.asarray(out), np.asarray(ref),
                               rtol=2e-3, atol=3e-3)

    print("KERNEL_OK")
</pallas_src>

<mosaic_0001>
module attributes {stable_mosaic.version = 11 : i64} {
  func.func @_upsample_kernel(%arg0: i32, %arg1: memref<1x8x8x64xf32, #tpu.memory_space<vmem>>, %arg2: memref<64x64xf32, #tpu.memory_space<vmem>>, %arg3: memref<1x64xf32, #tpu.memory_space<vmem>>, %arg4: memref<1x16x16x64xf32, #tpu.memory_space<vmem>>) attributes {dimension_semantics = [#tpu.dimension_semantics<parallel>], iteration_bounds = array<i64: 2>, scalar_prefetch = 0 : i64, scratch_operands = 0 : i64, tpu.core_type = #tpu.core_type<tc>, window_params = [{transform_indices = @transform_0, window_bounds = array<i64: 1, 8, 8, 64>}, {pipeline_mode = #tpu.pipeline_mode<synchronous>, transform_indices = @transform_1, window_bounds = array<i64: 64, 64>}, {pipeline_mode = #tpu.pipeline_mode<synchronous>, transform_indices = @transform_2, window_bounds = array<i64: 1, 64>}, {transform_indices = @transform_3, window_bounds = array<i64: 1, 16, 16, 64>}]} {
    %c0 = arith.constant 0 : index
    %c0_0 = arith.constant 0 : index
    %c0_1 = arith.constant 0 : index
    %c0_2 = arith.constant 0 : index
    %0 = vector.load %arg1[%c0, %c0_0, %c0_1, %c0_2] : memref<1x8x8x64xf32, #tpu.memory_space<vmem>>, vector<1x8x8x64xf32>
    %1 = vector.shape_cast %0 : vector<1x8x8x64xf32> to vector<8x8x64xf32>
    %2 = vector.shape_cast %1 : vector<8x8x64xf32> to vector<64x64xf32>
    %c0_3 = arith.constant 0 : index
    %c0_4 = arith.constant 0 : index
    %3 = vector.load %arg2[%c0_3, %c0_4] : memref<64x64xf32, #tpu.memory_space<vmem>>, vector<64x64xf32>
    %cst = arith.constant dense<0.000000e+00> : vector<64x64xf32>
    %4 = tpu.matmul %2, %3, %cst {dimension_numbers = #tpu.dot_dimension_numbers<[1], [0], [0], [1], [0, 0, 1, 1], [], []>} : vector<64x64xf32>, vector<64x64xf32>, vector<64x64xf32> -> vector<64x64xf32>
    %c0_5 = arith.constant 0 : index
    %c0_6 = arith.constant 0 : index
    %5 = vector.load %arg3[%c0_5, %c0_6] : memref<1x64xf32, #tpu.memory_space<vmem>>, vector<1x64xf32>
    %6 = vector.broadcast %5 : vector<1x64xf32> to vector<64x64xf32>
    %7 = arith.addf %4, %6 : vector<64x64xf32>
    %8 = vector.shape_cast %7 : vector<64x64xf32> to vector<8x8x64xf32>
    %9 = vector.extract_strided_slice %8 {offsets = [0, 0, 0], sizes = [1, 8, 64], strides = [1, 1, 1]} : vector<8x8x64xf32> to vector<1x8x64xf32>
    %10 = vector.shape_cast %9 : vector<1x8x64xf32> to vector<8x64xf32>
    %cst_7 = arith.constant 1.000000e+00 : f32
    %11 = vector.broadcast %cst_7 : f32 to vector<8x64xf32>
    %12 = arith.mulf %11, %10 : vector<8x64xf32>
    %13 = vector.extract_strided_slice %8 {offsets = [1, 0, 0], sizes = [1, 8, 64], strides = [1, 1, 1]} : vector<8x8x64xf32> to vector<1x8x64xf32>
    %14 = vector.shape_cast %13 : vector<1x8x64xf32> to vector<8x64xf32>
    %cst_8 = arith.constant 0.000000e+00 : f32
    %15 = vector.broadcast %cst_8 : f32 to vector<8x64xf32>
    %16 = arith.mulf %15, %14 : vector<8x64xf32>
    %17 = arith.addf %12, %16 : vector<8x64xf32>
    %18 = vector.shape_cast %17 : vector<8x64xf32> to vector<1x8x64xf32>
    %19 = vector.extract_strided_slice %8 {offsets = [0, 0, 0], sizes = [1, 8, 64], strides = [1, 1, 1]} : vector<8x8x64xf32> to vector<1x8x64xf32>
    %20 = vector.shape_cast %19 : vector<1x8x64xf32> to vector<8x64xf32>
    %cst_9 = arith.constant 0.533333361 : f32
    %21 = vector.broadcast %cst_9 : f32 to vector<8x64xf32>
    %22 = arith.mulf %21, %20 : vector<8x64xf32>
    %23 = vector.extract_strided_slice %8 {offsets = [1, 0, 0], sizes = [1, 8, 64], strides = [1, 1, 1]} : vector<8x8x64xf32> to vector<1x8x64xf32>
    %24 = vector.shape_cast %23 : vector<1x8x64xf32> to vector<8x64xf32>
    %cst_10 = arith.constant 0.466666669 : f32
    %25 = vector.broadcast %cst_10 : f32 to vector<8x64xf32>
    %26 = arith.mulf %25, %24 : vector<8x64xf32>
    %27 = arith.addf %22, %26 : vector<8x64xf32>
    %28 = vector.shape_cast %27 : vector<8x64xf32> to vector<1x8x64xf32>
    %29 = vector.extract_strided_slice %8 {offsets = [0, 0, 0], sizes = [1, 8, 64], strides = [1, 1, 1]} : vector<8x8x64xf32> to vector<1x8x64xf32>
    %30 = vector.shape_cast %29 : vector<1x8x64xf32> to vector<8x64xf32>
    %cst_11 = arith.constant 0.0666666701 : f32
    %31 = vector.broadcast %cst_11 : f32 to vector<8x64xf32>
    %32 = arith.mulf %31, %30 : vector<8x64xf32>
    %33 = vector.extract_strided_slice %8 {offsets = [1, 0, 0], sizes = [1, 8, 64], strides = [1, 1, 1]} : vector<8x8x64xf32> to vector<1x8x64xf32>
    %34 = vector.shape_cast %33 : vector<1x8x64xf32> to vector<8x64xf32>
    %cst_12 = arith.constant 0.933333337 : f32
    %35 = vector.broadcast %cst_12 : f32 to vector<8x64xf32>
    %36 = arith.mulf %35, %34 : vector<8x64xf32>
    %37 = arith.addf %32, %36 : vector<8x64xf32>
    %38 = vector.shape_cast %37 : vector<8x64xf32> to vector<1x8x64xf32>
    %39 = vector.extract_strided_slice %8 {offsets = [1, 0, 0], sizes = [1, 8, 64], strides = [1, 1, 1]} : vector<8x8x64xf32> to vector<1x8x64xf32>
    %40 = vector.shape_cast %39 : vector<1x8x64xf32> to vector<8x64xf32>
    %cst_13 = arith.constant 6.000000e-01 : f32
    %41 = vector.broadcast %cst_13 : f32 to vector<8x64xf32>
    %42 = arith.mulf %41, %40 : vector<8x64xf32>
    %43 = vector.extract_strided_slice %8 {offsets = [2, 0, 0], sizes = [1, 8, 64], strides = [1, 1, 1]} : vector<8x8x64xf32> to vector<1x8x64xf32>
    %44 = vector.shape_cast %43 : vector<1x8x64xf32> to vector<8x64xf32>
    %cst_14 = arith.constant 4.000000e-01 : f32
    %45 = vector.broadcast %cst_14 : f32 to vector<8x64xf32>
    %46 = arith.mulf %45, %44 : vector<8x64xf32>
    %47 = arith.addf %42, %46 : vector<8x64xf32>
    %48 = vector.shape_cast %47 : vector<8x64xf32> to vector<1x8x64xf32>
    %49 = vector.extract_strided_slice %8 {offsets = [1, 0, 0], sizes = [1, 8, 64], strides = [1, 1, 1]} : vector<8x8x64xf32> to vector<1x8x64xf32>
    %50 = vector.shape_cast %49 : vector<1x8x64xf32> to vector<8x64xf32>
    %cst_15 = arith.constant 0.13333334 : f32
    %51 = vector.broadcast %cst_15 : f32 to vector<8x64xf32>
    %52 = arith.mulf %51, %50 : vector<8x64xf32>
    %53 = vector.extract_strided_slice %8 {offsets = [2, 0, 0], sizes = [1, 8, 64], strides = [1, 1, 1]} : vector<8x8x64xf32> to vector<1x8x64xf32>
    %54 = vector.shape_cast %53 : vector<1x8x64xf32> to vector<8x64xf32>
    %cst_16 = arith.constant 0.866666674 : f32
    %55 = vector.broadcast %cst_16 : f32 to vector<8x64xf32>
    %56 = arith.mulf %55, %54 : vector<8x64xf32>
    %57 = arith.addf %52, %56 : vector<8x64xf32>
    %58 = vector.shape_cast %57 : vector<8x64xf32> to vector<1x8x64xf32>
    %59 = vector.extract_strided_slice %8 {offsets = [2, 0, 0], sizes = [1, 8, 64], strides = [1, 1, 1]} : vector<8x8x64xf32> to vector<1x8x64xf32>
    %60 = vector.shape_cast %59 : vector<1x8x64xf32> to vector<8x64xf32>
    %cst_17 = arith.constant 0.666666686 : f32
    %61 = vector.broadcast %cst_17 : f32 to vector<8x64xf32>
    %62 = arith.mulf %61, %60 : vector<8x64xf32>
    %63 = vector.extract_strided_slice %8 {offsets = [3, 0, 0], sizes = [1, 8, 64], strides = [1, 1, 1]} : vector<8x8x64xf32> to vector<1x8x64xf32>
    %64 = vector.shape_cast %63 : vector<1x8x64xf32> to vector<8x64xf32>
    %cst_18 = arith.constant 0.333333343 : f32
    %65 = vector.broadcast %cst_18 : f32 to vector<8x64xf32>
    %66 = arith.mulf %65, %64 : vector<8x64xf32>
    %67 = arith.addf %62, %66 : vector<8x64xf32>
    %68 = vector.shape_cast %67 : vector<8x64xf32> to vector<1x8x64xf32>
    %69 = vector.extract_strided_slice %8 {offsets = [2, 0, 0], sizes = [1, 8, 64], strides = [1, 1, 1]} : vector<8x8x64xf32> to vector<1x8x64xf32>
    %70 = vector.shape_cast %69 : vector<1x8x64xf32> to vector<8x64xf32>
    %cst_19 = arith.constant 2.000000e-01 : f32
    %71 = vector.broadcast %cst_19 : f32 to vector<8x64xf32>
    %72 = arith.mulf %71, %70 : vector<8x64xf32>
    %73 = vector.extract_strided_slice %8 {offsets = [3, 0, 0], sizes = [1, 8, 64], strides = [1, 1, 1]} : vector<8x8x64xf32> to vector<1x8x64xf32>
    %74 = vector.shape_cast %73 : vector<1x8x64xf32> to vector<8x64xf32>
    %cst_20 = arith.constant 8.000000e-01 : f32
    %75 = vector.broadcast %cst_20 : f32 to vector<8x64xf32>
    %76 = arith.mulf %75, %74 : vector<8x64xf32>
    %77 = arith.addf %72, %76 : vector<8x64xf32>
    %78 = vector.shape_cast %77 : vector<8x64xf32> to vector<1x8x64xf32>
    %79 = vector.extract_strided_slice %8 {offsets = [3, 0, 0], sizes = [1, 8, 64], strides = [1, 1, 1]} : vector<8x8x64xf32> to vector<1x8x64xf32>
    %80 = vector.shape_cast %79 : vector<1x8x64xf32> to vector<8x64xf32>
    %cst_21 = arith.constant 0.733333349 : f32
    %81 = vector.broadcast %cst_21 : f32 to vector<8x64xf32>
    %82 = arith.mulf %81, %80 : vector<8x64xf32>
    %83 = vector.extract_strided_slice %8 {offsets = [4, 0, 0], sizes = [1, 8, 64], strides = [1, 1, 1]} : vector<8x8x64xf32> to vector<1x8x64xf32>
    %84 = vector.shape_cast %83 : vector<1x8x64xf32> to vector<8x64xf32>
    %cst_22 = arith.constant 0.266666681 : f32
    %85 = vector.broadcast %cst_22 : f32 to vector<8x64xf32>
    %86 = arith.mulf %85, %84 : vector<8x64xf32>
    %87 = arith.addf %82, %86 : vector<8x64xf32>
    %88 = vector.shape_cast %87 : vector<8x64xf32> to vector<1x8x64xf32>
    %89 = vector.extract_strided_slice %8 {offsets = [3, 0, 0], sizes = [1, 8, 64], strides = [1, 1, 1]} : vector<8x8x64xf32> to vector<1x8x64xf32>
    %90 = vector.shape_cast %89 : vector<1x8x64xf32> to vector<8x64xf32>
    %cst_23 = arith.constant 0.266666681 : f32
    %91 = vector.broadcast %cst_23 : f32 to vector<8x64xf32>
    %92 = arith.mulf %91, %90 : vector<8x64xf32>
    %93 = vector.extract_strided_slice %8 {offsets = [4, 0, 0], sizes = [1, 8, 64], strides = [1, 1, 1]} : vector<8x8x64xf32> to vector<1x8x64xf32>
    %94 = vector.shape_cast %93 : vector<1x8x64xf32> to vector<8x64xf32>
    %cst_24 = arith.constant 0.733333349 : f32
    %95 = vector.broadcast %cst_24 : f32 to vector<8x64xf32>
    %96 = arith.mulf %95, %94 : vector<8x64xf32>
    %97 = arith.addf %92, %96 : vector<8x64xf32>
    %98 = vector.shape_cast %97 : vector<8x64xf32> to vector<1x8x64xf32>
    %99 = vector.extract_strided_slice %8 {offsets = [4, 0, 0], sizes = [1, 8, 64], strides = [1, 1, 1]} : vector<8x8x64xf32> to vector<1x8x64xf32>
    %100 = vector.shape_cast %99 : vector<1x8x64xf32> to vector<8x64xf32>
    %cst_25 = arith.constant 8.000000e-01 : f32
    %101 = vector.broadcast %cst_25 : f32 to vector<8x64xf32>
    %102 = arith.mulf %101, %100 : vector<8x64xf32>
    %103 = vector.extract_strided_slice %8 {offsets = [5, 0, 0], sizes = [1, 8, 64], strides = [1, 1, 1]} : vector<8x8x64xf32> to vector<1x8x64xf32>
    %104 = vector.shape_cast %103 : vector<1x8x64xf32> to vector<8x64xf32>
    %cst_26 = arith.constant 2.000000e-01 : f32
    %105 = vector.broadcast %cst_26 : f32 to vector<8x64xf32>
    %106 = arith.mulf %105, %104 : vector<8x64xf32>
    %107 = arith.addf %102, %106 : vector<8x64xf32>
    %108 = vector.shape_cast %107 : vector<8x64xf32> to vector<1x8x64xf32>
    %109 = vector.extract_strided_slice %8 {offsets = [4, 0, 0], sizes = [1, 8, 64], strides = [1, 1, 1]} : vector<8x8x64xf32> to vector<1x8x64xf32>
    %110 = vector.shape_cast %109 : vector<1x8x64xf32> to vector<8x64xf32>
    %cst_27 = arith.constant 0.333333343 : f32
    %111 = vector.broadcast %cst_27 : f32 to vector<8x64xf32>
    %112 = arith.mulf %111, %110 : vector<8x64xf32>
    %113 = vector.extract_strided_slice %8 {offsets = [5, 0, 0], sizes = [1, 8, 64], strides = [1, 1, 1]} : vector<8x8x64xf32> to vector<1x8x64xf32>
    %114 = vector.shape_cast %113 : vector<1x8x64xf32> to vector<8x64xf32>
    %cst_28 = arith.constant 0.666666686 : f32
    %115 = vector.broadcast %cst_28 : f32 to vector<8x64xf32>
    %116 = arith.mulf %115, %114 : vector<8x64xf32>
    %117 = arith.addf %112, %116 : vector<8x64xf32>
    %118 = vector.shape_cast %117 : vector<8x64xf32> to vector<1x8x64xf32>
    %119 = vector.extract_strided_slice %8 {offsets = [5, 0, 0], sizes = [1, 8, 64], strides = [1, 1, 1]} : vector<8x8x64xf32> to vector<1x8x64xf32>
    %120 = vector.shape_cast %119 : vector<1x8x64xf32> to vector<8x64xf32>
    %cst_29 = arith.constant 0.866666674 : f32
    %121 = vector.broadcast %cst_29 : f32 to vector<8x64xf32>
    %122 = arith.mulf %121, %120 : vector<8x64xf32>
    %123 = vector.extract_strided_slice %8 {offsets = [6, 0, 0], sizes = [1, 8, 64], strides = [1, 1, 1]} : vector<8x8x64xf32> to vector<1x8x64xf32>
    %124 = vector.shape_cast %123 : vector<1x8x64xf32> to vector<8x64xf32>
    %cst_30 = arith.constant 0.13333334 : f32
    %125 = vector.broadcast %cst_30 : f32 to vector<8x64xf32>
    %126 = arith.mulf %125, %124 : vector<8x64xf32>
    %127 = arith.addf %122, %126 : vector<8x64xf32>
    %128 = vector.shape_cast %127 : vector<8x64xf32> to vector<1x8x64xf32>
    %129 = vector.extract_strided_slice %8 {offsets = [5, 0, 0], sizes = [1, 8, 64], strides = [1, 1, 1]} : vector<8x8x64xf32> to vector<1x8x64xf32>
    %130 = vector.shape_cast %129 : vector<1x8x64xf32> to vector<8x64xf32>
    %cst_31 = arith.constant 4.000000e-01 : f32
    %131 = vector.broadcast %cst_31 : f32 to vector<8x64xf32>
    %132 = arith.mulf %131, %130 : vector<8x64xf32>
    %133 = vector.extract_strided_slice %8 {offsets = [6, 0, 0], sizes = [1, 8, 64], strides = [1, 1, 1]} : vector<8x8x64xf32> to vector<1x8x64xf32>
    %134 = vector.shape_cast %133 : vector<1x8x64xf32> to vector<8x64xf32>
    %cst_32 = arith.constant 6.000000e-01 : f32
    %135 = vector.broadcast %cst_32 : f32 to vector<8x64xf32>
    %136 = arith.mulf %135, %134 : vector<8x64xf32>
    %137 = arith.addf %132, %136 : vector<8x64xf32>
    %138 = vector.shape_cast %137 : vector<8x64xf32> to vector<1x8x64xf32>
    %139 = vector.extract_strided_slice %8 {offsets = [6, 0, 0], sizes = [1, 8, 64], strides = [1, 1, 1]} : vector<8x8x64xf32> to vector<1x8x64xf32>
    %140 = vector.shape_cast %139 : vector<1x8x64xf32> to vector<8x64xf32>
    %cst_33 = arith.constant 0.933333337 : f32
    %141 = vector.broadcast %cst_33 : f32 to vector<8x64xf32>
    %142 = arith.mulf %141, %140 : vector<8x64xf32>
    %143 = vector.extract_strided_slice %8 {offsets = [7, 0, 0], sizes = [1, 8, 64], strides = [1, 1, 1]} : vector<8x8x64xf32> to vector<1x8x64xf32>
    %144 = vector.shape_cast %143 : vector<1x8x64xf32> to vector<8x64xf32>
    %cst_34 = arith.constant 0.0666666701 : f32
    %145 = vector.broadcast %cst_34 : f32 to vector<8x64xf32>
    %146 = arith.mulf %145, %144 : vector<8x64xf32>
    %147 = arith.addf %142, %146 : vector<8x64xf32>
    %148 = vector.shape_cast %147 : vector<8x64xf32> to vector<1x8x64xf32>
    %149 = vector.extract_strided_slice %8 {offsets = [6, 0, 0], sizes = [1, 8, 64], strides = [1, 1, 1]} : vector<8x8x64xf32> to vector<1x8x64xf32>
    %150 = vector.shape_cast %149 : vector<1x8x64xf32> to vector<8x64xf32>
    %cst_35 = arith.constant 0.466666669 : f32
    %151 = vector.broadcast %cst_35 : f32 to vector<8x64xf32>
    %152 = arith.mulf %151, %150 : vector<8x64xf32>
    %153 = vector.extract_strided_slice %8 {offsets = [7, 0, 0], sizes = [1, 8, 64], strides = [1, 1, 1]} : vector<8x8x64xf32> to vector<1x8x64xf32>
    %154 = vector.shape_cast %153 : vector<1x8x64xf32> to vector<8x64xf32>
    %cst_36 = arith.constant 0.533333361 : f32
    %155 = vector.broadcast %cst_36 : f32 to vector<8x64xf32>
    %156 = arith.mulf %155, %154 : vector<8x64xf32>
    %157 = arith.addf %152, %156 : vector<8x64xf32>
    %158 = vector.shape_cast %157 : vector<8x64xf32> to vector<1x8x64xf32>
    %159 = vector.extract_strided_slice %8 {offsets = [7, 0, 0], sizes = [1, 8, 64], strides = [1, 1, 1]} : vector<8x8x64xf32> to vector<1x8x64xf32>
    %160 = vector.shape_cast %159 : vector<1x8x64xf32> to vector<8x64xf32>
    %cst_37 = arith.constant 1.000000e+00 : f32
    %161 = vector.broadcast %cst_37 : f32 to vector<8x64xf32>
    %162 = arith.mulf %161, %160 : vector<8x64xf32>
    %163 = vector.extract_strided_slice %8 {offsets = [7, 0, 0], sizes = [1, 8, 64], strides = [1, 1, 1]} : vector<8x8x64xf32> to vector<1x8x64xf32>
    %164 = vector.shape_cast %163 : vector<1x8x64xf32> to vector<8x64xf32>
    %cst_38 = arith.constant 0.000000e+00 : f32
    %165 = vector.broadcast %cst_38 : f32 to vector<8x64xf32>
    %166 = arith.mulf %165, %164 : vector<8x64xf32>
    %167 = arith.addf %162, %166 : vector<8x64xf32>
    %168 = vector.shape_cast %167 : vector<8x64xf32> to vector<1x8x64xf32>
    %169 = tpu.concatenate %18, %28, %38, %48, %58, %68, %78, %88, %98, %108, %118, %128, %138, %148, %158, %168 in 0 : vector<1x8x64xf32>, vector<1x8x64xf32>, vector<1x8x64xf32>, vector<1x8x64xf32>, vector<1x8x64xf32>, vector<1x8x64xf32>, vector<1x8x64xf32>, vector<1x8x64xf32>, vector<1x8x64xf32>, vector<1x8x64xf32>, vector<1x8x64xf32>, vector<1x8x64xf32>, vector<1x8x64xf32>, vector<1x8x64xf32>, vector<1x8x64xf32>, vector<1x8x64xf32> -> vector<16x8x64xf32>
    %170 = vector.extract_strided_slice %169 {offsets = [0, 0, 0], sizes = [16, 1, 64], strides = [1, 1, 1]} : vector<16x8x64xf32> to vector<16x1x64xf32>
    %171 = vector.shape_cast %170 : vector<16x1x64xf32> to vector<16x64xf32>
    %cst_39 = arith.constant 1.000000e+00 : f32
    %172 = vector.broadcast %cst_39 : f32 to vector<16x64xf32>
    %173 = arith.mulf %172, %171 : vector<16x64xf32>
    %174 = vector.extract_strided_slice %169 {offsets = [0, 1, 0], sizes = [16, 1, 64], strides = [1, 1, 1]} : vector<16x8x64xf32> to vector<16x1x64xf32>
    %175 = vector.shape_cast %174 : vector<16x1x64xf32> to vector<16x64xf32>
    %cst_40 = arith.constant 0.000000e+00 : f32
    %176 = vector.broadcast %cst_40 : f32 to vector<16x64xf32>
    %177 = arith.mulf %176, %175 : vector<16x64xf32>
    %178 = arith.addf %173, %177 : vector<16x64xf32>
    %179 = vector.shape_cast %178 : vector<16x64xf32> to vector<16x1x64xf32>
    %180 = vector.extract_strided_slice %169 {offsets = [0, 0, 0], sizes = [16, 1, 64], strides = [1, 1, 1]} : vector<16x8x64xf32> to vector<16x1x64xf32>
    %181 = vector.shape_cast %180 : vector<16x1x64xf32> to vector<16x64xf32>
    %cst_41 = arith.constant 0.533333361 : f32
    %182 = vector.broadcast %cst_41 : f32 to vector<16x64xf32>
    %183 = arith.mulf %182, %181 : vector<16x64xf32>
    %184 = vector.extract_strided_slice %169 {offsets = [0, 1, 0], sizes = [16, 1, 64], strides = [1, 1, 1]} : vector<16x8x64xf32> to vector<16x1x64xf32>
    %185 = vector.shape_cast %184 : vector<16x1x64xf32> to vector<16x64xf32>
    %cst_42 = arith.constant 0.466666669 : f32
    %186 = vector.broadcast %cst_42 : f32 to vector<16x64xf32>
    %187 = arith.mulf %186, %185 : vector<16x64xf32>
    %188 = arith.addf %183, %187 : vector<16x64xf32>
    %189 = vector.shape_cast %188 : vector<16x64xf32> to vector<16x1x64xf32>
    %190 = vector.extract_strided_slice %169 {offsets = [0, 0, 0], sizes = [16, 1, 64], strides = [1, 1, 1]} : vector<16x8x64xf32> to vector<16x1x64xf32>
    %191 = vector.shape_cast %190 : vector<16x1x64xf32> to vector<16x64xf32>
    %cst_43 = arith.constant 0.0666666701 : f32
    %192 = vector.broadcast %cst_43 : f32 to vector<16x64xf32>
    %193 = arith.mulf %192, %191 : vector<16x64xf32>
    %194 = vector.extract_strided_slice %169 {offsets = [0, 1, 0], sizes = [16, 1, 64], strides = [1, 1, 1]} : vector<16x8x64xf32> to vector<16x1x64xf32>
    %195 = vector.shape_cast %194 : vector<16x1x64xf32> to vector<16x64xf32>
    %cst_44 = arith.constant 0.933333337 : f32
    %196 = vector.broadcast %cst_44 : f32 to vector<16x64xf32>
    %197 = arith.mulf %196, %195 : vector<16x64xf32>
    %198 = arith.addf %193, %197 : vector<16x64xf32>
    %199 = vector.shape_cast %198 : vector<16x64xf32> to vector<16x1x64xf32>
    %200 = vector.extract_strided_slice %169 {offsets = [0, 1, 0], sizes = [16, 1, 64], strides = [1, 1, 1]} : vector<16x8x64xf32> to vector<16x1x64xf32>
    %201 = vector.shape_cast %200 : vector<16x1x64xf32> to vector<16x64xf32>
    %cst_45 = arith.constant 6.000000e-01 : f32
    %202 = vector.broadcast %cst_45 : f32 to vector<16x64xf32>
    %203 = arith.mulf %202, %201 : vector<16x64xf32>
    %204 = vector.extract_strided_slice %169 {offsets = [0, 2, 0], sizes = [16, 1, 64], strides = [1, 1, 1]} : vector<16x8x64xf32> to vector<16x1x64xf32>
    %205 = vector.shape_cast %204 : vector<16x1x64xf32> to vector<16x64xf32>
    %cst_46 = arith.constant 4.000000e-01 : f32
    %206 = vector.broadcast %cst_46 : f32 to vector<16x64xf32>
    %207 = arith.mulf %206, %205 : vector<16x64xf32>
    %208 = arith.addf %203, %207 : vector<16x64xf32>
    %209 = vector.shape_cast %208 : vector<16x64xf32> to vector<16x1x64xf32>
    %210 = vector.extract_strided_slice %169 {offsets = [0, 1, 0], sizes = [16, 1, 64], strides = [1, 1, 1]} : vector<16x8x64xf32> to vector<16x1x64xf32>
    %211 = vector.shape_cast %210 : vector<16x1x64xf32> to vector<16x64xf32>
    %cst_47 = arith.constant 0.13333334 : f32
    %212 = vector.broadcast %cst_47 : f32 to vector<16x64xf32>
    %213 = arith.mulf %212, %211 : vector<16x64xf32>
    %214 = vector.extract_strided_slice %169 {offsets = [0, 2, 0], sizes = [16, 1, 64], strides = [1, 1, 1]} : vector<16x8x64xf32> to vector<16x1x64xf32>
    %215 = vector.shape_cast %214 : vector<16x1x64xf32> to vector<16x64xf32>
    %cst_48 = arith.constant 0.866666674 : f32
    %216 = vector.broadcast %cst_48 : f32 to vector<16x64xf32>
    %217 = arith.mulf %216, %215 : vector<16x64xf32>
    %218 = arith.addf %213, %217 : vector<16x64xf32>
    %219 = vector.shape_cast %218 : vector<16x64xf32> to vector<16x1x64xf32>
    %220 = vector.extract_strided_slice %169 {offsets = [0, 2, 0], sizes = [16, 1, 64], strides = [1, 1, 1]} : vector<16x8x64xf32> to vector<16x1x64xf32>
    %221 = vector.shape_cast %220 : vector<16x1x64xf32> to vector<16x64xf32>
    %cst_49 = arith.constant 0.666666686 : f32
    %222 = vector.broadcast %cst_49 : f32 to vector<16x64xf32>
    %223 = arith.mulf %222, %221 : vector<16x64xf32>
    %224 = vector.extract_strided_slice %169 {offsets = [0, 3, 0], sizes = [16, 1, 64], strides = [1, 1, 1]} : vector<16x8x64xf32> to vector<16x1x64xf32>
    %225 = vector.shape_cast %224 : vector<16x1x64xf32> to vector<16x64xf32>
    %cst_50 = arith.constant 0.333333343 : f32
    %226 = vector.broadcast %cst_50 : f32 to vector<16x64xf32>
    %227 = arith.mulf %226, %225 : vector<16x64xf32>
    %228 = arith.addf %223, %227 : vector<16x64xf32>
    %229 = vector.shape_cast %228 : vector<16x64xf32> to vector<16x1x64xf32>
    %230 = vector.extract_strided_slice %169 {offsets = [0, 2, 0], sizes = [16, 1, 64], strides = [1, 1, 1]} : vector<16x8x64xf32> to vector<16x1x64xf32>
    %231 = vector.shape_cast %230 : vector<16x1x64xf32> to vector<16x64xf32>
    %cst_51 = arith.constant 2.000000e-01 : f32
    %232 = vector.broadcast %cst_51 : f32 to vector<16x64xf32>
    %233 = arith.mulf %232, %231 : vector<16x64xf32>
    %234 = vector.extract_strided_slice %169 {offsets = [0, 3, 0], sizes = [16, 1, 64], strides = [1, 1, 1]} : vector<16x8x64xf32> to vector<16x1x64xf32>
    %235 = vector.shape_cast %234 : vector<16x1x64xf32> to vector<16x64xf32>
    %cst_52 = arith.constant 8.000000e-01 : f32
    %236 = vector.broadcast %cst_52 : f32 to vector<16x64xf32>
    %237 = arith.mulf %236, %235 : vector<16x64xf32>
    %238 = arith.addf %233, %237 : vector<16x64xf32>
    %239 = vector.shape_cast %238 : vector<16x64xf32> to vector<16x1x64xf32>
    %240 = vector.extract_strided_slice %169 {offsets = [0, 3, 0], sizes = [16, 1, 64], strides = [1, 1, 1]} : vector<16x8x64xf32> to vector<16x1x64xf32>
    %241 = vector.shape_cast %240 : vector<16x1x64xf32> to vector<16x64xf32>
    %cst_53 = arith.constant 0.733333349 : f32
    %242 = vector.broadcast %cst_53 : f32 to vector<16x64xf32>
    %243 = arith.mulf %242, %241 : vector<16x64xf32>
    %244 = vector.extract_strided_slice %169 {offsets = [0, 4, 0], sizes = [16, 1, 64], strides = [1, 1, 1]} : vector<16x8x64xf32> to vector<16x1x64xf32>
    %245 = vector.shape_cast %244 : vector<16x1x64xf32> to vector<16x64xf32>
    %cst_54 = arith.constant 0.266666681 : f32
    %246 = vector.broadcast %cst_54 : f32 to vector<16x64xf32>
    %247 = arith.mulf %246, %245 : vector<16x64xf32>
    %248 = arith.addf %243, %247 : vector<16x64xf32>
    %249 = vector.shape_cast %248 : vector<16x64xf32> to vector<16x1x64xf32>
    %250 = vector.extract_strided_slice %169 {offsets = [0, 3, 0], sizes = [16, 1, 64], strides = [1, 1, 1]} : vector<16x8x64xf32> to vector<16x1x64xf32>
    %251 = vector.shape_cast %250 : vector<16x1x64xf32> to vector<16x64xf32>
    %cst_55 = arith.constant 0.266666681 : f32
    %252 = vector.broadcast %cst_55 : f32 to vector<16x64xf32>
    %253 = arith.mulf %252, %251 : vector<16x64xf32>
    %254 = vector.extract_strided_slice %169 {offsets = [0, 4, 0], sizes = [16, 1, 64], strides = [1, 1, 1]} : vector<16x8x64xf32> to vector<16x1x64xf32>
    %255 = vector.shape_cast %254 : vector<16x1x64xf32> to vector<16x64xf32>
    %cst_56 = arith.constant 0.733333349 : f32
    %256 = vector.broadcast %cst_56 : f32 to vector<16x64xf32>
    %257 = arith.mulf %256, %255 : vector<16x64xf32>
    %258 = arith.addf %253, %257 : vector<16x64xf32>
    %259 = vector.shape_cast %258 : vector<16x64xf32> to vector<16x1x64xf32>
    %260 = vector.extract_strided_slice %169 {offsets = [0, 4, 0], sizes = [16, 1, 64], strides = [1, 1, 1]} : vector<16x8x64xf32> to vector<16x1x64xf32>
    %261 = vector.shape_cast %260 : vector<16x1x64xf32> to vector<16x64xf32>
    %cst_57 = arith.constant 8.000000e-01 : f32
    %262 = vector.broadcast %cst_57 : f32 to vector<16x64xf32>
    %263 = arith.mulf %262, %261 : vector<16x64xf32>
    %264 = vector.extract_strided_slice %169 {offsets = [0, 5, 0], sizes = [16, 1, 64], strides = [1, 1, 1]} : vector<16x8x64xf32> to vector<16x1x64xf32>
    %265 = vector.shape_cast %264 : vector<16x1x64xf32> to vector<16x64xf32>
    %cst_58 = arith.constant 2.000000e-01 : f32
    %266 = vector.broadcast %cst_58 : f32 to vector<16x64xf32>
    %267 = arith.mulf %266, %265 : vector<16x64xf32>
    %268 = arith.addf %263, %267 : vector<16x64xf32>
    %269 = vector.shape_cast %268 : vector<16x64xf32> to vector<16x1x64xf32>
    %270 = vector.extract_strided_slice %169 {offsets = [0, 4, 0], sizes = [16, 1, 64], strides = [1, 1, 1]} : vector<16x8x64xf32> to vector<16x1x64xf32>
    %271 = vector.shape_cast %270 : vector<16x1x64xf32> to vector<16x64xf32>
    %cst_59 = arith.constant 0.333333343 : f32
    %272 = vector.broadcast %cst_59 : f32 to vector<16x64xf32>
    %273 = arith.mulf %272, %271 : vector<16x64xf32>
    %274 = vector.extract_strided_slice %169 {offsets = [0, 5, 0], sizes = [16, 1, 64], strides = [1, 1, 1]} : vector<16x8x64xf32> to vector<16x1x64xf32>
    %275 = vector.shape_cast %274 : vector<16x1x64xf32> to vector<16x64xf32>
    %cst_60 = arith.constant 0.666666686 : f32
    %276 = vector.broadcast %cst_60 : f32 to vector<16x64xf32>
    %277 = arith.mulf %276, %275 : vector<16x64xf32>
    %278 = arith.addf %273, %277 : vector<16x64xf32>
    %279 = vector.shape_cast %278 : vector<16x64xf32> to vector<16x1x64xf32>
    %280 = vector.extract_strided_slice %169 {offsets = [0, 5, 0], sizes = [16, 1, 64], strides = [1, 1, 1]} : vector<16x8x64xf32> to vector<16x1x64xf32>
    %281 = vector.shape_cast %280 : vector<16x1x64xf32> to vector<16x64xf32>
    %cst_61 = arith.constant 0.866666674 : f32
    %282 = vector.broadcast %cst_61 : f32 to vector<16x64xf32>
    %283 = arith.mulf %282, %281 : vector<16x64xf32>
    %284 = vector.extract_strided_slice %169 {offsets = [0, 6, 0], sizes = [16, 1, 64], strides = [1, 1, 1]} : vector<16x8x64xf32> to vector<16x1x64xf32>
    %285 = vector.shape_cast %284 : vector<16x1x64xf32> to vector<16x64xf32>
    %cst_62 = arith.constant 0.13333334 : f32
    %286 = vector.broadcast %cst_62 : f32 to vector<16x64xf32>
    %287 = arith.mulf %286, %285 : vector<16x64xf32>
    %288 = arith.addf %283, %287 : vector<16x64xf32>
    %289 = vector.shape_cast %288 : vector<16x64xf32> to vector<16x1x64xf32>
    %290 = vector.extract_strided_slice %169 {offsets = [0, 5, 0], sizes = [16, 1, 64], strides = [1, 1, 1]} : vector<16x8x64xf32> to vector<16x1x64xf32>
    %291 = vector.shape_cast %290 : vector<16x1x64xf32> to vector<16x64xf32>
    %cst_63 = arith.constant 4.000000e-01 : f32
    %292 = vector.broadcast %cst_63 : f32 to vector<16x64xf32>
    %293 = arith.mulf %292, %291 : vector<16x64xf32>
    %294 = vector.extract_strided_slice %169 {offsets = [0, 6, 0], sizes = [16, 1, 64], strides = [1, 1, 1]} : vector<16x8x64xf32> to vector<16x1x64xf32>
    %295 = vector.shape_cast %294 : vector<16x1x64xf32> to vector<16x64xf32>
    %cst_64 = arith.constant 6.000000e-01 : f32
    %296 = vector.broadcast %cst_64 : f32 to vector<16x64xf32>
    %297 = arith.mulf %296, %295 : vector<16x64xf32>
    %298 = arith.addf %293, %297 : vector<16x64xf32>
    %299 = vector.shape_cast %298 : vector<16x64xf32> to vector<16x1x64xf32>
    %300 = vector.extract_strided_slice %169 {offsets = [0, 6, 0], sizes = [16, 1, 64], strides = [1, 1, 1]} : vector<16x8x64xf32> to vector<16x1x64xf32>
    %301 = vector.shape_cast %300 : vector<16x1x64xf32> to vector<16x64xf32>
    %cst_65 = arith.constant 0.933333337 : f32
    %302 = vector.broadcast %cst_65 : f32 to vector<16x64xf32>
    %303 = arith.mulf %302, %301 : vector<16x64xf32>
    %304 = vector.extract_strided_slice %169 {offsets = [0, 7, 0], sizes = [16, 1, 64], strides = [1, 1, 1]} : vector<16x8x64xf32> to vector<16x1x64xf32>
    %305 = vector.shape_cast %304 : vector<16x1x64xf32> to vector<16x64xf32>
    %cst_66 = arith.constant 0.0666666701 : f32
    %306 = vector.broadcast %cst_66 : f32 to vector<16x64xf32>
    %307 = arith.mulf %306, %305 : vector<16x64xf32>
    %308 = arith.addf %303, %307 : vector<16x64xf32>
    %309 = vector.shape_cast %308 : vector<16x64xf32> to vector<16x1x64xf32>
    %310 = vector.extract_strided_slice %169 {offsets = [0, 6, 0], sizes = [16, 1, 64], strides = [1, 1, 1]} : vector<16x8x64xf32> to vector<16x1x64xf32>
    %311 = vector.shape_cast %310 : vector<16x1x64xf32> to vector<16x64xf32>
    %cst_67 = arith.constant 0.466666669 : f32
    %312 = vector.broadcast %cst_67 : f32 to vector<16x64xf32>
    %313 = arith.mulf %312, %311 : vector<16x64xf32>
    %314 = vector.extract_strided_slice %169 {offsets = [0, 7, 0], sizes = [16, 1, 64], strides = [1, 1, 1]} : vector<16x8x64xf32> to vector<16x1x64xf32>
    %315 = vector.shape_cast %314 : vector<16x1x64xf32> to vector<16x64xf32>
    %cst_68 = arith.constant 0.533333361 : f32
    %316 = vector.broadcast %cst_68 : f32 to vector<16x64xf32>
    %317 = arith.mulf %316, %315 : vector<16x64xf32>
    %318 = arith.addf %313, %317 : vector<16x64xf32>
    %319 = vector.shape_cast %318 : vector<16x64xf32> to vector<16x1x64xf32>
    %320 = vector.extract_strided_slice %169 {offsets = [0, 7, 0], sizes = [16, 1, 64], strides = [1, 1, 1]} : vector<16x8x64xf32> to vector<16x1x64xf32>
    %321 = vector.shape_cast %320 : vector<16x1x64xf32> to vector<16x64xf32>
    %cst_69 = arith.constant 1.000000e+00 : f32
    %322 = vector.broadcast %cst_69 : f32 to vector<16x64xf32>
    %323 = arith.mulf %322, %321 : vector<16x64xf32>
    %324 = vector.extract_strided_slice %169 {offsets = [0, 7, 0], sizes = [16, 1, 64], strides = [1, 1, 1]} : vector<16x8x64xf32> to vector<16x1x64xf32>
    %325 = vector.shape_cast %324 : vector<16x1x64xf32> to vector<16x64xf32>
    %cst_70 = arith.constant 0.000000e+00 : f32
    %326 = vector.broadcast %cst_70 : f32 to vector<16x64xf32>
    %327 = arith.mulf %326, %325 : vector<16x64xf32>
    %328 = arith.addf %323, %327 : vector<16x64xf32>
    %329 = vector.shape_cast %328 : vector<16x64xf32> to vector<16x1x64xf32>
    %330 = tpu.concatenate %179, %189, %199, %209, %219, %229, %239, %249, %259, %269, %279, %289, %299, %309, %319, %329 in 1 : vector<16x1x64xf32>, vector<16x1x64xf32>, vector<16x1x64xf32>, vector<16x1x64xf32>, vector<16x1x64xf32>, vector<16x1x64xf32>, vector<16x1x64xf32>, vector<16x1x64xf32>, vector<16x1x64xf32>, vector<16x1x64xf32>, vector<16x1x64xf32>, vector<16x1x64xf32>, vector<16x1x64xf32>, vector<16x1x64xf32>, vector<16x1x64xf32>, vector<16x1x64xf32> -> vector<16x16x64xf32>
    %331 = vector.shape_cast %330 : vector<16x16x64xf32> to vector<1x16x16x64xf32>
    %c0_71 = arith.constant 0 : index
    %c0_72 = arith.constant 0 : index
    %c0_73 = arith.constant 0 : index
    %c0_74 = arith.constant 0 : index
    %332 = vector.load %arg4[%c0_71, %c0_72, %c0_73, %c0_74] : memref<1x16x16x64xf32, #tpu.memory_space<vmem>>, vector<1x16x16x64xf32>
    tpu.vector_store %arg4[%c0_71, %c0_72, %c0_73, %c0_74], %331 {strides = array<i32>} : memref<1x16x16x64xf32, #tpu.memory_space<vmem>>, vector<1x16x16x64xf32>,
    return
  }
  func.func @transform_0(%arg0: i32) -> (i32, i32, i32, i32) {
    %c0_i32 = arith.constant 0 : i32
    %c0_i32_0 = arith.constant 0 : i32
    %c0_i32_1 = arith.constant 0 : i32
    %c0_i32_2 = arith.constant 0 : i32
    return %arg0, %c0_i32, %c0_i32_0, %c0_i32_1 : i32, i32, i32, i32
  }
  func.func @transform_1(%arg0: i32) -> (i32, i32) {
    %c0_i32 = arith.constant 0 : i32
    %c0_i32_0 = arith.constant 0 : i32
    %c0_i32_1 = arith.constant 0 : i32
    return %c0_i32, %c0_i32_0 : i32, i32
  }
  func.func @transform_2(%arg0: i32) -> (i32, i32) {
    %c0_i32 = arith.constant 0 : i32
    %c0_i32_0 = arith.constant 0 : i32
    %c0_i32_1 = arith.constant 0 : i32
    return %c0_i32, %c0_i32_0 : i32, i32
  }
  func.func @transform_3(%arg0: i32) -> (i32, i32, i32, i32) {
    %c0_i32 = arith.constant 0 : i32
    %c0_i32_0 = arith.constant 0 : i32
    %c0_i32_1 = arith.constant 0 : i32
    %c0_i32_2 = arith.constant 0 : i32
    return %arg0, %c0_i32, %c0_i32_0, %c0_i32_1 : i32, i32, i32, i32
  }
}

</mosaic_0001>

<llo_original>
// kernel: tpu_custom_call.1
$region0: #{tpu_custom_call.1}
  #allocation0 [shape = 'u32[]', space=smem, size = 0x4, offset = 0x4, fixed_abs, tag = 'smem constant byte address 0x4 - core index']
  #allocation1 [shape = 'u32[144,128]{1,0:T(1,128)}', space=vmem, size = 0x12000, scoped, tag = 'internal scratch']
  %s0 = inlined_call_operand.hbm [shape: f32[2,8,8,64], index: 0, kind: input, shape index: {}]
  %s1 = inlined_call_operand.hbm [shape: f32[64,64], index: 1, kind: input, shape index: {}]
  %s2 = inlined_call_operand.vmem [shape: f32[1,64], index: 2, kind: input, shape index: {}]
  %s3 = inlined_call_operand.hbm [shape: f32[2,16,16,64], index: 3, kind: output, shape index: {}]
  %s4 = sld [smem:[#allocation0]]
  $region53: #{tpu_custom_call.1} parent=0
    _
  %s6 = ssub.s32 1, %s4
  %s7 = scalar_select 0, %s6, %s4
  $region1: #{tpu_custom_call.1} parent=0
    #allocation2 [shape = 'u8[65536]{0}', space=vmem, size = 0x10000, scoped, tag = 'input window, operand 0']
    #allocation3 [shape = 's32[2]{0}', space=sflag, size = 0x8, scoped, tag = 'scoped memory for tpu_custom_call.1']
    #allocation4 [shape = 's32[2]{0}', space=sflag, size = 0x8, scoped, tag = 'scoped memory for tpu_custom_call.1']
    #allocation5 [shape = 'u8[32768]{0}', space=vmem, size = 0x8000, scoped, tag = 'input window, operand 1, single buffered']
    #allocation6 [shape = 's32[1]{0}', space=sflag, size = 0x4, scoped, tag = 'scoped memory for tpu_custom_call.1']
    #allocation7 [shape = 'u8[262144]{0}', space=vmem, size = 0x40000, scoped, tag = 'output window, operand 0']
    %8 = vsyncpa [#allocation3], 0
    %s9 = scalar_lea.sflag [#allocation3], 1
    %10 = vsyncpa %s9, 0
    %11 = vsyncpa [#allocation6], 0
    %12 = vsyncpa [#allocation4], 0
    %s13 = scalar_lea.sflag [#allocation4], 1
    %14 = vsyncpa %s13, 0
    loop: start=0, step=1, limit=4
    $region2: #{tpu_custom_call.1} parent=1 // loop_pre_header
      _
    $region3: #{tpu_custom_call.1} parent=1 // loop_header
      %s16 = sphi 0, %s20
      %p17 = scmp.ge.s32.totalorder %s16, 4
      %s26 = sphi 0, %s28
      %s29 = sphi 0, %s26
      %s30 = sphi 0, %s29
      %s46 = sphi 0, %s30
      %s50 = sphi 0, %s50
      %s52 = sphi 0, %s50
      %s53 = sphi 0, %s52
      %s67 = sphi 0, %s53
      %s71 = sphi 0, %s71
      %s73 = sphi 0, %s71
      %s74 = sphi 0, %s73
      %s88 = sphi 0, %s74
      %s94 = sphi 0, %s96
      %s97 = sphi 0, %s94
      %s98 = sphi 0, %s97
      %s114 = sphi 0, %s98
    $region4: #{tpu_custom_call.1} parent=1 // loop_header_branch
      %19 = sbr.rel (%p17) target = $region8
    $region5: #{tpu_custom_call.1} parent=1 // loop_body
      %s21 = ssub.s32 %s16, 1
      %s22 = ssub.s32 %s16, 2
      %s23 = sadd.s32 %s16, 1
      %s24 = ssub.s32 %s16, %s23
      %p25 = scmp.eq.s32.totalorder %s24, 0
      %s27 = sadd.s32 %s26, 1
      %s28 = scalar_select %p25, %s26, %s27
      %p31 = pneg %p25
      %p32 = scmp.eq.s32.totalorder %s16, 1
      %p33 = por %p31, %p32
      %p34 = scmp.ne.s32.totalorder %s26, %s29
      %p35 = scmp.eq.s32.totalorder %s16, 0
      %p36 = por %p34, %p35
      %p37 = scmp.ne.s32.totalorder %s26, %s29
      %p38 = scmp.eq.s32.totalorder %s21, 1
      %p39 = por %p37, %p38
      %p40 = scmp.ne.s32.totalorder %s29, %s30
      %p41 = scmp.eq.s32.totalorder %s21, 0
      %p42 = por %p40, %p41
      %p43 = scmp.ne.s32.totalorder %s29, %s30
      %p44 = scmp.eq.s32.totalorder %s22, 1
      %p45 = por %p43, %p44
      %p47 = scmp.ne.s32.totalorder %s30, %s46
      %p48 = scmp.eq.s32.totalorder %s22, 0
      %p49 = por %p47, %p48
      %s51 = sadd.s32 %s50, 1
      %p54 = scmp.eq.s32.totalorder %s16, 1
      %p55 = scmp.ne.s32.totalorder %s50, %s52
      %p56 = scmp.eq.s32.totalorder %s16, 0
      %p57 = por %p55, %p56
      %p58 = scmp.ne.s32.totalorder %s50, %s52
      %p59 = scmp.eq.s32.totalorder %s21, 1
      %p60 = por %p58, %p59
      %p61 = scmp.ne.s32.totalorder %s52, %s53
      %p62 = scmp.eq.s32.totalorder %s21, 0
      %p63 = por %p61, %p62
      %p64 = scmp.ne.s32.totalorder %s52, %s53
      %p65 = scmp.eq.s32.totalorder %s22, 1
      %p66 = por %p64, %p65
      %p68 = scmp.ne.s32.totalorder %s53, %s67
      %p69 = scmp.eq.s32.totalorder %s22, 0
      %p70 = por %p68, %p69
      %s72 = sadd.s32 %s71, 1
      %p75 = scmp.eq.s32.totalorder %s16, 1
      %p76 = scmp.ne.s32.totalorder %s71, %s73
      %p77 = scmp.eq.s32.totalorder %s16, 0
      %p78 = por %p76, %p77
      %p79 = scmp.ne.s32.totalorder %s71, %s73
      %p80 = scmp.eq.s32.totalorder %s21, 1
      %p81 = por %p79, %p80
      %p82 = scmp.ne.s32.totalorder %s73, %s74
      %p83 = scmp.eq.s32.totalorder %s21, 0
      %p84 = por %p82, %p83
      %p85 = scmp.ne.s32.totalorder %s73, %s74
      %p86 = scmp.eq.s32.totalorder %s22, 1
      %p87 = por %p85, %p86
      %p89 = scmp.ne.s32.totalorder %s74, %s88
      %p90 = scmp.eq.s32.totalorder %s22, 0
      %p91 = por %p89, %p90
      %s92 = ssub.s32 %s16, %s23
      %p93 = scmp.eq.s32.totalorder %s92, 0
      %s95 = sadd.s32 %s94, 1
      %s96 = scalar_select %p93, %s94, %s95
      %p99 = pneg %p93
      %p100 = scmp.eq.s32.totalorder %s16, 1
      %p101 = por %p99, %p100
      %p102 = scmp.ne.s32.totalorder %s94, %s97
      %p103 = scmp.eq.s32.totalorder %s16, 0
      %p104 = por %p102, %p103
      %p105 = scmp.ne.s32.totalorder %s94, %s97
      %p106 = scmp.eq.s32.totalorder %s21, 1
      %p107 = por %p105, %p106
      %p108 = scmp.ne.s32.totalorder %s97, %s98
      %p109 = scmp.eq.s32.totalorder %s21, 0
      %p110 = por %p108, %p109
      %p111 = scmp.ne.s32.totalorder %s97, %s98
      %p112 = scmp.eq.s32.totalorder %s22, 1
      %p113 = por %p111, %p112
      %p115 = scmp.ne.s32.totalorder %s98, %s114
      %p116 = scmp.eq.s32.totalorder %s22, 0
      %p117 = por %p115, %p116
      %p118 = scmp.le.s32.totalorder 1, %s16
      %p119 = scmp.lt.s32.totalorder %s16, 3
      %p120 = pnand %p118, %p119
      %p121 = pneg %p120
      // Predicated region
      $region9: #{tpu_custom_call.1} parent=5 // pred_check
        _
      $region10: #{tpu_custom_call.1} parent=5 // pred_check_branch
        %123 = sbr.rel (%p120) target = $region12
      $region11: #{tpu_custom_call.1} parent=5 // pred_region
        %s124 = ssub.s32 %s16, 1
        // Predicated region
        $region13: #{tpu_custom_call.1} parent=11 // pred_check
          %p125 = pneg %p63
        $region14: #{tpu_custom_call.1} parent=11 // pred_check_branch
          %127 = sbr.rel (%p125) target = $region16
        $region15: #{tpu_custom_call.1} parent=11 // pred_region
          %s129 = ssub.s32 1024, 1024
          %130 = vsyncadd [#allocation6], %s129
          %s131 = sshll.u32 [#allocation5], 4
          %s132 = int_to_ptr.vmem [resolvable:$true] %s131
          %137 = dma.hbm_to_vmem [thread:$0]  %s1, 1024, %s132, [#allocation6], 128, 128, 8
        $region16: #{tpu_custom_call.1} parent=11 // pred_fallthru
          _
        // Predicated region
        $region17: #{tpu_custom_call.1} parent=11 // pred_check
          %p138 = pneg %p84
        $region18: #{tpu_custom_call.1} parent=11 // pred_check_branch
          %140 = sbr.rel (%p138) target = $region20
        $region19: #{tpu_custom_call.1} parent=11 // pred_region
          _
        $region20: #{tpu_custom_call.1} parent=11 // pred_fallthru
          _
      $region12: #{tpu_custom_call.1} parent=5 // pred_fallthru
        _
      %p141 = scmp.lt.s32.totalorder %s16, 2
      // Predicated region
      $region21: #{tpu_custom_call.1} parent=5 // pred_check
        %p142 = pneg %p141
      $region22: #{tpu_custom_call.1} parent=5 // pred_check_branch
        %144 = sbr.rel (%p142) target = $region24
      $region23: #{tpu_custom_call.1} parent=5 // pred_region
        // Predicated region
        $region25: #{tpu_custom_call.1} parent=23 // pred_check
          %p145 = pneg %p36
        $region26: #{tpu_custom_call.1} parent=23 // pred_check_branch
          %147 = sbr.rel (%p145) target = $region28
        $region27: #{tpu_custom_call.1} parent=23 // pred_region
          %s148 = sand.u32 %s26, 1
          %s149 = scalar_lea.sflag [#allocation3], %s148
          %s150 = sand.u32 %s26, 1
          %s151 = smul.addr %s150, 64
          %s152 = scalar_lea.vmem [#allocation2], %s151
          %s154 = ssub.s32 1024, 1024
          %155 = vsyncadd %s149, %s154
          %s156 = smul.addr %s16, 8
          %s157 = smul.addr %s156, 128
          %s158 = scalar_lea.hbm %s0, %s157
          %s159 = sshll.u32 %s152, 4
          %s160 = int_to_ptr.vmem [resolvable:$true] %s159
          %165 = dma.hbm_to_vmem [thread:$0]  %s158, 1024, %s160, %s149, 128, 128, 8
        $region28: #{tpu_custom_call.1} parent=23 // pred_fallthru
          _
      $region24: #{tpu_custom_call.1} parent=5 // pred_fallthru
        _
      %p166 = scmp.le.s32.totalorder 1, %s16
      %p167 = scmp.lt.s32.totalorder %s16, 3
      %p168 = pnand %p166, %p167
      %p169 = pneg %p168
      // Predicated region
      $region29: #{tpu_custom_call.1} parent=5 // pred_check
        _
      $region30: #{tpu_custom_call.1} parent=5 // pred_check_branch
        %171 = sbr.rel (%p168) target = $region32
      $region31: #{tpu_custom_call.1} parent=5 // pred_region
        %s172 = ssub.s32 %s16, 1
        %s173 = sand.u32 %s29, 1
        %s174 = scalar_lea.sflag [#allocation3], %s173
        %s175 = sand.u32 %s29, 1
        %s176 = smul.addr %s175, 64
        %s177 = scalar_lea.vmem [#allocation2], %s176
        // Predicated region
        $region33: #{tpu_custom_call.1} parent=31 // pred_check
          %p178 = pneg %p42
        $region34: #{tpu_custom_call.1} parent=31 // pred_check_branch
          %180 = sbr.rel (%p178) target = $region36
        $region35: #{tpu_custom_call.1} parent=31 // pred_region
          %181 = dma.done %s174, 1024
        $region36: #{tpu_custom_call.1} parent=31 // pred_fallthru
          _
        // Predicated region
        $region37: #{tpu_custom_call.1} parent=31 // pred_check
          %p182 = pneg %p63
        $region38: #{tpu_custom_call.1} parent=31 // pred_check_branch
          %184 = sbr.rel (%p182) target = $region40
        $region39: #{tpu_custom_call.1} parent=31 // pred_region
          %185 = dma.done [#allocation6], 1024
        $region40: #{tpu_custom_call.1} parent=31 // pred_fallthru
          _
        %s186 = sand.u32 %s29, 1
        %s187 = scalar_lea.sflag [#allocation3], %s186
        %s188 = sand.u32 %s29, 1
        %s189 = smul.addr %s188, 64
        %s190 = scalar_lea.vmem [#allocation2], %s189
        %p191 = pneg %p42
        %p192 = pneg %p39
        %p193 = pneg %p63
        %p194 = pneg %p60
        %p195 = pneg %p84
        %p196 = pneg %p81
        %p197 = pneg %p110
        %p198 = pneg %p107
        %s199 = sand.u32 %s97, 1
        %s200 = scalar_lea.sflag [#allocation4], %s199
        %s201 = sand.u32 %s97, 1
        %s202 = smul.addr %s201, 256
        %s203 = scalar_lea.vmem [#allocation7], %s202
        %v204 = vld [vmem:[%s177] sm:$0xff]
        %v205 = vld [vmem:[%s177 + $0x8] sm:$0xff]
        %v206 = vld [vmem:[%s177 + $0x10] sm:$0xff]
        %v207 = vld [vmem:[%s177 + $0x18] sm:$0xff]
        %v208 = vld [vmem:[%s177 + $0x20] sm:$0xff]
        %v209 = vld [vmem:[%s177 + $0x28] sm:$0xff]
        %v210 = vld [vmem:[%s177 + $0x30] sm:$0xff]
        %v211 = vld [vmem:[%s177 + $0x38] sm:$0xff]
        %v212 = vld [vmem:[#allocation5] sm:$0xff]
        %v213 = vld [vmem:[#allocation5 + $0x8] sm:$0xff]
        %v214 = vld [vmem:[#allocation5 + $0x10] sm:$0xff]
        %v215 = vld [vmem:[#allocation5 + $0x18] sm:$0xff]
        %v216 = vld [vmem:[#allocation5 + $0x20] sm:$0xff]
        %v217 = vld [vmem:[#allocation5 + $0x28] sm:$0xff]
        %v218 = vld [vmem:[#allocation5 + $0x30] sm:$0xff]
        %v219 = vld [vmem:[#allocation5 + $0x38] sm:$0xff]
        %v220 = vld [vmem:[%s2] sm:$0x1]
        %v222 = vlaneseq
        %v223 = vshrl.u32 %v222, 7
        %v224 = vsub.s32 0, %v223
        %v225 = vrot.slane %v220, %v224
        %vm227 = vcmask 523264
        %v229 = vsel %vm227, %v204, 0
        %v232 = vsel %vm227, %v205, 0
        %v235 = vsel %vm227, %v206, 0
        %v238 = vsel %vm227, %v207, 0
        %v241 = vsel %vm227, %v208, 0
        %v244 = vsel %vm227, %v209, 0
        %v247 = vsel %vm227, %v210, 0
        %v250 = vsel %vm227, %v211, 0
        %252 = vmatprep.subr.mxu0 0.0
        %253 = vmatpush1.msra.mxu0 %v212
        %254 = vmatprep.subr.mxu0 0.0
        %255 = vmatpush1.msra.mxu0 %v213
        %256 = vmatprep.subr.mxu0 0.0
        %257 = vmatpush1.msra.mxu0 %v214
        %258 = vmatprep.subr.mxu0 0.0
        %259 = vmatpush1.msra.mxu0 %v215
        %260 = vmatprep.subr.mxu0 0.0
        %261 = vmatpush1.msra.mxu0 %v216
        %262 = vmatprep.subr.mxu0 0.0
        %263 = vmatpush1.msra.mxu0 %v217
        %264 = vmatprep.subr.mxu0 0.0
        %265 = vmatpush1.msra.mxu0 %v218
        %266 = vmatprep.subr.mxu0 0.0
        %267 = vmatpush1.msra.mxu0 %v219
        %268 = vmatprep.subr.mxu0 0.0
        %269 = vmatpush1.msra.mxu0 0.0
        %270 = vmatprep.subr.mxu0 0.0
        %271 = vmatpush1.msra.mxu0 0.0
        %272 = vmatprep.subr.mxu0 0.0
        %273 = vmatpush1.msra.mxu0 0.0
        %274 = vmatprep.subr.mxu0 0.0
        %275 = vmatpush1.msra.mxu0 0.0
        %276 = vmatprep.subr.mxu0 0.0
        %277 = vmatpush1.msra.mxu0 0.0
        %278 = vmatprep.subr.mxu0 0.0
        %279 = vmatpush1.msra.mxu0 0.0
        %280 = vmatprep.subr.mxu0 0.0
        %281 = vmatpush1.msra.mxu0 0.0
        %282 = vmatprep.subr.mxu0 0.0
        %283 = vmatpush1.msra.mxu0 0.0
        %284 = vmatprep.subr.mxu0 0.0
        %285 = vmatpush1.msra.mxu0 0.0
        %286 = vmatprep.subr.mxu0 0.0
        %287 = vmatpush1.msra.mxu0 0.0
        %288 = vmatprep.subr.mxu0 0.0
        %289 = vmatpush1.msra.mxu0 0.0
        %290 = vmatprep.subr.mxu0 0.0
        %291 = vmatpush1.msra.mxu0 0.0
        %292 = vmatprep.subr.mxu0 0.0
        %293 = vmatpush1.msra.mxu0 0.0
        %294 = vmatprep.subr.mxu0 0.0
        %295 = vmatpush1.msra.mxu0 0.0
        %296 = vmatprep.subr.mxu0 0.0
        %297 = vmatpush1.msra.mxu0 0.0
        %298 = vmatprep.subr.mxu0 0.0
        %299 = vmatpush1.msra.mxu0 0.0
        %300 = vmatprep.subr.mxu0 0.0
        %301 = vmatpush1.msra.mxu0 0.0
        %302 = vmatprep.subr.mxu0 0.0
        %303 = vmatpush1.msra.mxu0 0.0
        %304 = vmatprep.subr.mxu0 0.0
        %305 = vmatpush1.msra.mxu0 0.0
        %306 = vmatprep.subr.mxu0 0.0
        %307 = vmatpush1.msra.mxu0 0.0
        %308 = vmatprep.subr.mxu0 0.0
        %309 = vmatpush1.msra.mxu0 0.0
        %310 = vmatprep.subr.mxu0 0.0
        %311 = vmatpush1.msra.mxu0 0.0
        %312 = vmatprep.subr.mxu0 0.0
        %313 = vmatpush1.msra.mxu0 0.0
        %314 = vmatprep.subr.mxu0 0.0
        %315 = vmatpush1.msra.mxu0 0.0
        %316 = vmatprep.mubr.f32.mxu0 0.0
        %317 = vmatmul.mubr.f32.gmra.mrb[0].mxu0 %v229
        %v318 = vpop.f32.mrb[0].mxu0
        %v319 = vadd.f32 %v225, %v318
        %v320 = vpop.f32.mrb[0].mxu0
        %321 = vmatprep.mubr.f32.mxu0 0.0
        %322 = vmatmul.mubr.f32.gmra.mrb[0].mxu0 %v232
        %v323 = vpop.f32.mrb[0].mxu0
        %v324 = vadd.f32 %v225, %v323
        %v325 = vpop.f32.mrb[0].mxu0
        %326 = vmatprep.mubr.f32.mxu0 0.0
        %327 = vmatmul.mubr.f32.gmra.mrb[0].mxu0 %v235
        %v328 = vpop.f32.mrb[0].mxu0
        %v329 = vadd.f32 %v225, %v328
        %v330 = vpop.f32.mrb[0].mxu0
        %331 = vmatprep.mubr.f32.mxu0 0.0
        %332 = vmatmul.mubr.f32.gmra.mrb[0].mxu0 %v238
        %v333 = vpop.f32.mrb[0].mxu0
        %v334 = vadd.f32 %v225, %v333
        %v335 = vpop.f32.mrb[0].mxu0
        %336 = vmatprep.mubr.f32.mxu0 0.0
        %337 = vmatmul.mubr.f32.gmra.mrb[0].mxu0 %v241
        %v338 = vpop.f32.mrb[0].mxu0
        %v339 = vadd.f32 %v225, %v338
        %v340 = vpop.f32.mrb[0].mxu0
        %341 = vmatprep.mubr.f32.mxu0 0.0
        %342 = vmatmul.mubr.f32.gmra.mrb[0].mxu0 %v244
        %v343 = vpop.f32.mrb[0].mxu0
        %v344 = vadd.f32 %v225, %v343
        %v345 = vpop.f32.mrb[0].mxu0
        %346 = vmatprep.mubr.f32.mxu0 0.0
        %347 = vmatmul.mubr.f32.gmra.mrb[0].mxu0 %v247
        %v348 = vpop.f32.mrb[0].mxu0
        %v349 = vadd.f32 %v225, %v348
        %v350 = vpop.f32.mrb[0].mxu0
        %351 = vmatprep.mubr.f32.mxu0 0.0
        %352 = vmatmul.mubr.f32.gmra.mrb[0].mxu0 %v250
        %v353 = vpop.f32.mrb[0].mxu0
        %v354 = vadd.f32 %v225, %v353
        %v355 = vpop.f32.mrb[0].mxu0
        %356 = vdwg.mxu0
        %v357 = vmul.f32 %v324, 0.0
        %v358 = vadd.f32 %v319, %v357
        %v359 = vmul.f32 %v319, 0.53333336
        %v360 = vmul.f32 %v324, 0.46666667
        %v361 = vadd.f32 %v359, %v360
        %v362 = vmul.f32 %v319, 0.06666667
        %v363 = vmul.f32 %v324, 0.93333334
        %v364 = vadd.f32 %v362, %v363
        %v365 = vmul.f32 %v324, 0.6
        %v366 = vmul.f32 %v329, 0.4
        %v367 = vadd.f32 %v365, %v366
        %v368 = vmul.f32 %v324, 0.13333334
        %v369 = vmul.f32 %v329, 0.8666667
        %v370 = vadd.f32 %v368, %v369
        %v371 = vmul.f32 %v329, 0.6666667
        %v372 = vmul.f32 %v334, 0.33333334
        %v373 = vadd.f32 %v371, %v372
        %v374 = vmul.f32 %v329, 0.2
        %v375 = vmul.f32 %v334, 0.8
        %v376 = vadd.f32 %v374, %v375
        %v377 = vmul.f32 %v334, 0.73333335
        %v378 = vmul.f32 %v339, 0.26666668
        %v379 = vadd.f32 %v377, %v378
        %v380 = vmul.f32 %v334, 0.26666668
        %v381 = vmul.f32 %v339, 0.73333335
        %v382 = vadd.f32 %v380, %v381
        %v383 = vmul.f32 %v339, 0.8
        %v384 = vmul.f32 %v344, 0.2
        %v385 = vadd.f32 %v383, %v384
        %v386 = vmul.f32 %v339, 0.33333334
        %v387 = vmul.f32 %v344, 0.6666667
        %v388 = vadd.f32 %v386, %v387
        %v389 = vmul.f32 %v344, 0.8666667
        %v390 = vmul.f32 %v349, 0.13333334
        %v391 = vadd.f32 %v389, %v390
        %v392 = vmul.f32 %v344, 0.4
        %v393 = vmul.f32 %v349, 0.6
        %v394 = vadd.f32 %v392, %v393
        %v395 = vmul.f32 %v349, 0.93333334
        %v396 = vmul.f32 %v354, 0.06666667
        %v397 = vadd.f32 %v395, %v396
        %v398 = vmul.f32 %v349, 0.46666667
        %v399 = vmul.f32 %v354, 0.53333336
        %v400 = vadd.f32 %v398, %v399
        %v401 = vmul.f32 %v354, 0.0
        %v402 = vadd.f32 %v354, %v401
        %v403 = vmul.f32 %v358, 0.0
        %v404 = vmul.f32 %v361, 0.0
        %v405 = vmul.f32 %v364, 0.0
        %v406 = vmul.f32 %v367, 0.0
        %v407 = vmul.f32 %v370, 0.0
        %v408 = vmul.f32 %v373, 0.0
        %v409 = vmul.f32 %v376, 0.0
        %v410 = vmul.f32 %v379, 0.0
        %v411 = vmul.f32 %v382, 0.0
        %v412 = vmul.f32 %v385, 0.0
        %v413 = vmul.f32 %v388, 0.0
        %v414 = vmul.f32 %v391, 0.0
        %v415 = vmul.f32 %v394, 0.0
        %v416 = vmul.f32 %v397, 0.0
        %v417 = vmul.f32 %v400, 0.0
        %v418 = vmul.f32 %v402, 0.0
        %v435 = vrot.slane %v403, 1
        %v436 = vrot.slane %v404, 1
        %v437 = vrot.slane %v405, 1
        %v438 = vrot.slane %v406, 1
        %v439 = vrot.slane %v407, 1
        %v440 = vrot.slane %v408, 1
        %v441 = vrot.slane %v409, 1
        %v442 = vrot.slane %v410, 1
        %v443 = vrot.slane %v411, 1
        %v444 = vrot.slane %v412, 1
        %v445 = vrot.slane %v413, 1
        %v446 = vrot.slane %v414, 1
        %v447 = vrot.slane %v415, 1
        %v448 = vrot.slane %v416, 1
        %v449 = vrot.slane %v417, 1
        %v450 = vrot.slane %v418, 1
        %v467 = vadd.f32 %v358, %v435
        %v468 = vadd.f32 %v361, %v436
        %v469 = vadd.f32 %v364, %v437
        %v470 = vadd.f32 %v367, %v438
        %v471 = vadd.f32 %v370, %v439
        %v472 = vadd.f32 %v373, %v440
        %v473 = vadd.f32 %v376, %v441
        %v474 = vadd.f32 %v379, %v442
        %v475 = vadd.f32 %v382, %v443
        %v476 = vadd.f32 %v385, %v444
        %v477 = vadd.f32 %v388, %v445
        %v478 = vadd.f32 %v391, %v446
        %v479 = vadd.f32 %v394, %v447
        %v480 = vadd.f32 %v397, %v448
        %v481 = vadd.f32 %v400, %v449
        %v482 = vadd.f32 %v402, %v450
        %v483 = vmul.f32 %v358, 0.53333336
        %v484 = vmul.f32 %v361, 0.53333336
        %v485 = vmul.f32 %v364, 0.53333336
        %v486 = vmul.f32 %v367, 0.53333336
        %v487 = vmul.f32 %v370, 0.53333336
        %v488 = vmul.f32 %v373, 0.53333336
        %v489 = vmul.f32 %v376, 0.53333336
        %v490 = vmul.f32 %v379, 0.53333336
        %v491 = vmul.f32 %v382, 0.53333336
        %v492 = vmul.f32 %v385, 0.53333336
        %v493 = vmul.f32 %v388, 0.53333336
        %v494 = vmul.f32 %v391, 0.53333336
        %v495 = vmul.f32 %v394, 0.53333336
        %v496 = vmul.f32 %v397, 0.53333336
        %v497 = vmul.f32 %v400, 0.53333336
        %v498 = vmul.f32 %v402, 0.53333336
        %v499 = vmul.f32 %v358, 0.46666667
        %v500 = vmul.f32 %v361, 0.46666667
        %v501 = vmul.f32 %v364, 0.46666667
        %v502 = vmul.f32 %v367, 0.46666667
        %v503 = vmul.f32 %v370, 0.46666667
        %v504 = vmul.f32 %v373, 0.46666667
        %v505 = vmul.f32 %v376, 0.46666667
        %v506 = vmul.f32 %v379, 0.46666667
        %v507 = vmul.f32 %v382, 0.46666667
        %v508 = vmul.f32 %v385, 0.46666667
        %v509 = vmul.f32 %v388, 0.46666667
        %v510 = vmul.f32 %v391, 0.46666667
        %v511 = vmul.f32 %v394, 0.46666667
        %v512 = vmul.f32 %v397, 0.46666667
        %v513 = vmul.f32 %v400, 0.46666667
        %v514 = vmul.f32 %v402, 0.46666667
        %v531 = vrot.slane %v499, 1
        %v532 = vrot.slane %v500, 1
        %v533 = vrot.slane %v501, 1
        %v534 = vrot.slane %v502, 1
        %v535 = vrot.slane %v503, 1
        %v536 = vrot.slane %v504, 1
        %v537 = vrot.slane %v505, 1
        %v538 = vrot.slane %v506, 1
        %v539 = vrot.slane %v507, 1
        %v540 = vrot.slane %v508, 1
        %v541 = vrot.slane %v509, 1
        %v542 = vrot.slane %v510, 1
        %v543 = vrot.slane %v511, 1
        %v544 = vrot.slane %v512, 1
        %v545 = vrot.slane %v513, 1
        %v546 = vrot.slane %v514, 1
        %v563 = vadd.f32 %v483, %v531
        %v564 = vadd.f32 %v484, %v532
        %v565 = vadd.f32 %v485, %v533
        %v566 = vadd.f32 %v486, %v534
        %v567 = vadd.f32 %v487, %v535
        %v568 = vadd.f32 %v488, %v536
        %v569 = vadd.f32 %v489, %v537
        %v570 = vadd.f32 %v490, %v538
        %v571 = vadd.f32 %v491, %v539
        %v572 = vadd.f32 %v492, %v540
        %v573 = vadd.f32 %v493, %v541
        %v574 = vadd.f32 %v494, %v542
        %v575 = vadd.f32 %v495, %v543
        %v576 = vadd.f32 %v496, %v544
        %v577 = vadd.f32 %v497, %v545
        %v578 = vadd.f32 %v498, %v546
        %v579 = vmul.f32 %v358, 0.06666667
        %v580 = vmul.f32 %v361, 0.06666667
        %v581 = vmul.f32 %v364, 0.06666667
        %v582 = vmul.f32 %v367, 0.06666667
        %v583 = vmul.f32 %v370, 0.06666667
        %v584 = vmul.f32 %v373, 0.06666667
        %v585 = vmul.f32 %v376, 0.06666667
        %v586 = vmul.f32 %v379, 0.06666667
        %v587 = vmul.f32 %v382, 0.06666667
        %v588 = vmul.f32 %v385, 0.06666667
        %v589 = vmul.f32 %v388, 0.06666667
        %v590 = vmul.f32 %v391, 0.06666667
        %v591 = vmul.f32 %v394, 0.06666667
        %v592 = vmul.f32 %v397, 0.06666667
        %v593 = vmul.f32 %v400, 0.06666667
        %v594 = vmul.f32 %v402, 0.06666667
        %v595 = vmul.f32 %v358, 0.93333334
        %v596 = vmul.f32 %v361, 0.93333334
        %v597 = vmul.f32 %v364, 0.93333334
        %v598 = vmul.f32 %v367, 0.93333334
        %v599 = vmul.f32 %v370, 0.93333334
        %v600 = vmul.f32 %v373, 0.93333334
        %v601 = vmul.f32 %v376, 0.93333334
        %v602 = vmul.f32 %v379, 0.93333334
        %v603 = vmul.f32 %v382, 0.93333334
        %v604 = vmul.f32 %v385, 0.93333334
        %v605 = vmul.f32 %v388, 0.93333334
        %v606 = vmul.f32 %v391, 0.93333334
        %v607 = vmul.f32 %v394, 0.93333334
        %v608 = vmul.f32 %v397, 0.93333334
        %v609 = vmul.f32 %v400, 0.93333334
        %v610 = vmul.f32 %v402, 0.93333334
        %v627 = vrot.slane %v595, 1
        %v628 = vrot.slane %v596, 1
        %v629 = vrot.slane %v597, 1
        %v630 = vrot.slane %v598, 1
        %v631 = vrot.slane %v599, 1
        %v632 = vrot.slane %v600, 1
        %v633 = vrot.slane %v601, 1
        %v634 = vrot.slane %v602, 1
        %v635 = vrot.slane %v603, 1
        %v636 = vrot.slane %v604, 1
        %v637 = vrot.slane %v605, 1
        %v638 = vrot.slane %v606, 1
        %v639 = vrot.slane %v607, 1
        %v640 = vrot.slane %v608, 1
        %v641 = vrot.slane %v609, 1
        %v642 = vrot.slane %v610, 1
        %v659 = vadd.f32 %v579, %v627
        %v660 = vadd.f32 %v580, %v628
        %v661 = vadd.f32 %v581, %v629
        %v662 = vadd.f32 %v582, %v630
        %v663 = vadd.f32 %v583, %v631
        %v664 = vadd.f32 %v584, %v632
        %v665 = vadd.f32 %v585, %v633
        %v666 = vadd.f32 %v586, %v634
        %v667 = vadd.f32 %v587, %v635
        %v668 = vadd.f32 %v588, %v636
        %v669 = vadd.f32 %v589, %v637
        %v670 = vadd.f32 %v590, %v638
        %v671 = vadd.f32 %v591, %v639
        %v672 = vadd.f32 %v592, %v640
        %v673 = vadd.f32 %v593, %v641
        %v674 = vadd.f32 %v594, %v642
        %v675 = vmul.f32 %v358, 0.6
        %v676 = vmul.f32 %v361, 0.6
        %v677 = vmul.f32 %v364, 0.6
        %v678 = vmul.f32 %v367, 0.6
        %v679 = vmul.f32 %v370, 0.6
        %v680 = vmul.f32 %v373, 0.6
        %v681 = vmul.f32 %v376, 0.6
        %v682 = vmul.f32 %v379, 0.6
        %v683 = vmul.f32 %v382, 0.6
        %v684 = vmul.f32 %v385, 0.6
        %v685 = vmul.f32 %v388, 0.6
        %v686 = vmul.f32 %v391, 0.6
        %v687 = vmul.f32 %v394, 0.6
        %v688 = vmul.f32 %v397, 0.6
        %v689 = vmul.f32 %v400, 0.6
        %v690 = vmul.f32 %v402, 0.6
        %v691 = vmul.f32 %v358, 0.4
        %v692 = vmul.f32 %v361, 0.4
        %v693 = vmul.f32 %v364, 0.4
        %v694 = vmul.f32 %v367, 0.4
        %v695 = vmul.f32 %v370, 0.4
        %v696 = vmul.f32 %v373, 0.4
        %v697 = vmul.f32 %v376, 0.4
        %v698 = vmul.f32 %v379, 0.4
        %v699 = vmul.f32 %v382, 0.4
        %v700 = vmul.f32 %v385, 0.4
        %v701 = vmul.f32 %v388, 0.4
        %v702 = vmul.f32 %v391, 0.4
        %v703 = vmul.f32 %v394, 0.4
        %v704 = vmul.f32 %v397, 0.4
        %v705 = vmul.f32 %v400, 0.4
        %v706 = vmul.f32 %v402, 0.4
        %v723 = vrot.slane %v691, 1
        %v724 = vrot.slane %v692, 1
        %v725 = vrot.slane %v693, 1
        %v726 = vrot.slane %v694, 1
        %v727 = vrot.slane %v695, 1
        %v728 = vrot.slane %v696, 1
        %v729 = vrot.slane %v697, 1
        %v730 = vrot.slane %v698, 1
        %v731 = vrot.slane %v699, 1
        %v732 = vrot.slane %v700, 1
        %v733 = vrot.slane %v701, 1
        %v734 = vrot.slane %v702, 1
        %v735 = vrot.slane %v703, 1
        %v736 = vrot.slane %v704, 1
        %v737 = vrot.slane %v705, 1
        %v738 = vrot.slane %v706, 1
        %v755 = vadd.f32 %v675, %v723
        %v756 = vadd.f32 %v676, %v724
        %v757 = vadd.f32 %v677, %v725
        %v758 = vadd.f32 %v678, %v726
        %v759 = vadd.f32 %v679, %v727
        %v760 = vadd.f32 %v680, %v728
        %v761 = vadd.f32 %v681, %v729
        %v762 = vadd.f32 %v682, %v730
        %v763 = vadd.f32 %v683, %v731
        %v764 = vadd.f32 %v684, %v732
        %v765 = vadd.f32 %v685, %v733
        %v766 = vadd.f32 %v686, %v734
        %v767 = vadd.f32 %v687, %v735
        %v768 = vadd.f32 %v688, %v736
        %v769 = vadd.f32 %v689, %v737
        %v770 = vadd.f32 %v690, %v738
        %v771 = vmul.f32 %v358, 0.13333334
        %v772 = vmul.f32 %v361, 0.13333334
        %v773 = vmul.f32 %v364, 0.13333334
        %v774 = vmul.f32 %v367, 0.13333334
        %v775 = vmul.f32 %v370, 0.13333334
        %v776 = vmul.f32 %v373, 0.13333334
        %v777 = vmul.f32 %v376, 0.13333334
        %v778 = vmul.f32 %v379, 0.13333334
        %v779 = vmul.f32 %v382, 0.13333334
        %v780 = vmul.f32 %v385, 0.13333334
        %v781 = vmul.f32 %v388, 0.13333334
        %v782 = vmul.f32 %v391, 0.13333334
        %v783 = vmul.f32 %v394, 0.13333334
        %v784 = vmul.f32 %v397, 0.13333334
        %v785 = vmul.f32 %v400, 0.13333334
        %v786 = vmul.f32 %v402, 0.13333334
        %v787 = vmul.f32 %v358, 0.8666667
        %v788 = vmul.f32 %v361, 0.8666667
        %v789 = vmul.f32 %v364, 0.8666667
        %v790 = vmul.f32 %v367, 0.8666667
        %v791 = vmul.f32 %v370, 0.8666667
        %v792 = vmul.f32 %v373, 0.8666667
        %v793 = vmul.f32 %v376, 0.8666667
        %v794 = vmul.f32 %v379, 0.8666667
        %v795 = vmul.f32 %v382, 0.8666667
        %v796 = vmul.f32 %v385, 0.8666667
        %v797 = vmul.f32 %v388, 0.8666667
        %v798 = vmul.f32 %v391, 0.8666667
        %v799 = vmul.f32 %v394, 0.8666667
        %v800 = vmul.f32 %v397, 0.8666667
        %v801 = vmul.f32 %v400, 0.8666667
        %v802 = vmul.f32 %v402, 0.8666667
        %v819 = vrot.slane %v787, 1
        %v820 = vrot.slane %v788, 1
        %v821 = vrot.slane %v789, 1
        %v822 = vrot.slane %v790, 1
        %v823 = vrot.slane %v791, 1
        %v824 = vrot.slane %v792, 1
        %v825 = vrot.slane %v793, 1
        %v826 = vrot.slane %v794, 1
        %v827 = vrot.slane %v795, 1
        %v828 = vrot.slane %v796, 1
        %v829 = vrot.slane %v797, 1
        %v830 = vrot.slane %v798, 1
        %v831 = vrot.slane %v799, 1
        %v832 = vrot.slane %v800, 1
        %v833 = vrot.slane %v801, 1
        %v834 = vrot.slane %v802, 1
        %v851 = vadd.f32 %v771, %v819
        %v852 = vadd.f32 %v772, %v820
        %v853 = vadd.f32 %v773, %v821
        %v854 = vadd.f32 %v774, %v822
        %v855 = vadd.f32 %v775, %v823
        %v856 = vadd.f32 %v776, %v824
        %v857 = vadd.f32 %v777, %v825
        %v858 = vadd.f32 %v778, %v826
        %v859 = vadd.f32 %v779, %v827
        %v860 = vadd.f32 %v780, %v828
        %v861 = vadd.f32 %v781, %v829
        %v862 = vadd.f32 %v782, %v830
        %v863 = vadd.f32 %v783, %v831
        %v864 = vadd.f32 %v784, %v832
        %v865 = vadd.f32 %v785, %v833
        %v866 = vadd.f32 %v786, %v834
        %v867 = vmul.f32 %v358, 0.6666667
        %v868 = vmul.f32 %v361, 0.6666667
        %v869 = vmul.f32 %v364, 0.6666667
        %v870 = vmul.f32 %v367, 0.6666667
        %v871 = vmul.f32 %v370, 0.6666667
        %v872 = vmul.f32 %v373, 0.6666667
        %v873 = vmul.f32 %v376, 0.6666667
        %v874 = vmul.f32 %v379, 0.6666667
        %v875 = vmul.f32 %v382, 0.6666667
        %v876 = vmul.f32 %v385, 0.6666667
        %v877 = vmul.f32 %v388, 0.6666667
        %v878 = vmul.f32 %v391, 0.6666667
        %v879 = vmul.f32 %v394, 0.6666667
        %v880 = vmul.f32 %v397, 0.6666667
        %v881 = vmul.f32 %v400, 0.6666667
        %v882 = vmul.f32 %v402, 0.6666667
        %v883 = vmul.f32 %v358, 0.33333334
        %v884 = vmul.f32 %v361, 0.33333334
        %v885 = vmul.f32 %v364, 0.33333334
        %v886 = vmul.f32 %v367, 0.33333334
        %v887 = vmul.f32 %v370, 0.33333334
        %v888 = vmul.f32 %v373, 0.33333334
        %v889 = vmul.f32 %v376, 0.33333334
        %v890 = vmul.f32 %v379, 0.33333334
        %v891 = vmul.f32 %v382, 0.33333334
        %v892 = vmul.f32 %v385, 0.33333334
        %v893 = vmul.f32 %v388, 0.33333334
        %v894 = vmul.f32 %v391, 0.33333334
        %v895 = vmul.f32 %v394, 0.33333334
        %v896 = vmul.f32 %v397, 0.33333334
        %v897 = vmul.f32 %v400, 0.33333334
        %v898 = vmul.f32 %v402, 0.33333334
        %v915 = vrot.slane %v883, 1
        %v916 = vrot.slane %v884, 1
        %v917 = vrot.slane %v885, 1
        %v918 = vrot.slane %v886, 1
        %v919 = vrot.slane %v887, 1
        %v920 = vrot.slane %v888, 1
        %v921 = vrot.slane %v889, 1
        %v922 = vrot.slane %v890, 1
        %v923 = vrot.slane %v891, 1
        %v924 = vrot.slane %v892, 1
        %v925 = vrot.slane %v893, 1
        %v926 = vrot.slane %v894, 1
        %v927 = vrot.slane %v895, 1
        %v928 = vrot.slane %v896, 1
        %v929 = vrot.slane %v897, 1
        %v930 = vrot.slane %v898, 1
        %v947 = vadd.f32 %v867, %v915
        %v948 = vadd.f32 %v868, %v916
        %v949 = vadd.f32 %v869, %v917
        %v950 = vadd.f32 %v870, %v918
        %v951 = vadd.f32 %v871, %v919
        %v952 = vadd.f32 %v872, %v920
        %v953 = vadd.f32 %v873, %v921
        %v954 = vadd.f32 %v874, %v922
        %v955 = vadd.f32 %v875, %v923
        %v956 = vadd.f32 %v876, %v924
        %v957 = vadd.f32 %v877, %v925
        %v958 = vadd.f32 %v878, %v926
        %v959 = vadd.f32 %v879, %v927
        %v960 = vadd.f32 %v880, %v928
        %v961 = vadd.f32 %v881, %v929
        %v962 = vadd.f32 %v882, %v930
        %v963 = vmul.f32 %v358, 0.2
        %v964 = vmul.f32 %v361, 0.2
        %v965 = vmul.f32 %v364, 0.2
        %v966 = vmul.f32 %v367, 0.2
        %v967 = vmul.f32 %v370, 0.2
        %v968 = vmul.f32 %v373, 0.2
        %v969 = vmul.f32 %v376, 0.2
        %v970 = vmul.f32 %v379, 0.2
        %v971 = vmul.f32 %v382, 0.2
        %v972 = vmul.f32 %v385, 0.2
        %v973 = vmul.f32 %v388, 0.2
        %v974 = vmul.f32 %v391, 0.2
        %v975 = vmul.f32 %v394, 0.2
        %v976 = vmul.f32 %v397, 0.2
        %v977 = vmul.f32 %v400, 0.2
        %v978 = vmul.f32 %v402, 0.2
        %v979 = vmul.f32 %v358, 0.8
        %v980 = vmul.f32 %v361, 0.8
        %v981 = vmul.f32 %v364, 0.8
        %v982 = vmul.f32 %v367, 0.8
        %v983 = vmul.f32 %v370, 0.8
        %v984 = vmul.f32 %v373, 0.8
        %v985 = vmul.f32 %v376, 0.8
        %v986 = vmul.f32 %v379, 0.8
        %v987 = vmul.f32 %v382, 0.8
        %v988 = vmul.f32 %v385, 0.8
        %v989 = vmul.f32 %v388, 0.8
        %v990 = vmul.f32 %v391, 0.8
        %v991 = vmul.f32 %v394, 0.8
        %v992 = vmul.f32 %v397, 0.8
        %v993 = vmul.f32 %v400, 0.8
        %v994 = vmul.f32 %v402, 0.8
        %v1011 = vrot.slane %v979, 1
        %v1012 = vrot.slane %v980, 1
        %v1013 = vrot.slane %v981, 1
        %v1014 = vrot.slane %v982, 1
        %v1015 = vrot.slane %v983, 1
        %v1016 = vrot.slane %v984, 1
        %v1017 = vrot.slane %v985, 1
        %v1018 = vrot.slane %v986, 1
        %v1019 = vrot.slane %v987, 1
        %v1020 = vrot.slane %v988, 1
        %v1021 = vrot.slane %v989, 1
        %v1022 = vrot.slane %v990, 1
        %v1023 = vrot.slane %v991, 1
        %v1024 = vrot.slane %v992, 1
        %v1025 = vrot.slane %v993, 1
        %v1026 = vrot.slane %v994, 1
        %v1043 = vadd.f32 %v963, %v1011
        %v1044 = vadd.f32 %v964, %v1012
        %v1045 = vadd.f32 %v965, %v1013
        %v1046 = vadd.f32 %v966, %v1014
        %v1047 = vadd.f32 %v967, %v1015
        %v1048 = vadd.f32 %v968, %v1016
        %v1049 = vadd.f32 %v969, %v1017
        %v1050 = vadd.f32 %v970, %v1018
        %v1051 = vadd.f32 %v971, %v1019
        %v1052 = vadd.f32 %v972, %v1020
        %v1053 = vadd.f32 %v973, %v1021
        %v1054 = vadd.f32 %v974, %v1022
        %v1055 = vadd.f32 %v975, %v1023
        %v1056 = vadd.f32 %v976, %v1024
        %v1057 = vadd.f32 %v977, %v1025
        %v1058 = vadd.f32 %v978, %v1026
        %v1059 = vmul.f32 %v358, 0.73333335
        %v1060 = vmul.f32 %v361, 0.73333335
        %v1061 = vmul.f32 %v364, 0.73333335
        %v1062 = vmul.f32 %v367, 0.73333335
        %v1063 = vmul.f32 %v370, 0.73333335
        %v1064 = vmul.f32 %v373, 0.73333335
        %v1065 = vmul.f32 %v376, 0.73333335
        %v1066 = vmul.f32 %v379, 0.73333335
        %v1067 = vmul.f32 %v382, 0.73333335
        %v1068 = vmul.f32 %v385, 0.73333335
        %v1069 = vmul.f32 %v388, 0.73333335
        %v1070 = vmul.f32 %v391, 0.73333335
        %v1071 = vmul.f32 %v394, 0.73333335
        %v1072 = vmul.f32 %v397, 0.73333335
        %v1073 = vmul.f32 %v400, 0.73333335
        %v1074 = vmul.f32 %v402, 0.73333335
        %v1075 = vmul.f32 %v358, 0.26666668
        %v1076 = vmul.f32 %v361, 0.26666668
        %v1077 = vmul.f32 %v364, 0.26666668
        %v1078 = vmul.f32 %v367, 0.26666668
        %v1079 = vmul.f32 %v370, 0.26666668
        %v1080 = vmul.f32 %v373, 0.26666668
        %v1081 = vmul.f32 %v376, 0.26666668
        %v1082 = vmul.f32 %v379, 0.26666668
        %v1083 = vmul.f32 %v382, 0.26666668
        %v1084 = vmul.f32 %v385, 0.26666668
        %v1085 = vmul.f32 %v388, 0.26666668
        %v1086 = vmul.f32 %v391, 0.26666668
        %v1087 = vmul.f32 %v394, 0.26666668
        %v1088 = vmul.f32 %v397, 0.26666668
        %v1089 = vmul.f32 %v400, 0.26666668
        %v1090 = vmul.f32 %v402, 0.26666668
        %v1107 = vrot.slane %v1075, 1
        %v1108 = vrot.slane %v1076, 1
        %v1109 = vrot.slane %v1077, 1
        %v1110 = vrot.slane %v1078, 1
        %v1111 = vrot.slane %v1079, 1
        %v1112 = vrot.slane %v1080, 1
        %v1113 = vrot.slane %v1081, 1
        %v1114 = vrot.slane %v1082, 1
        %v1115 = vrot.slane %v1083, 1
        %v1116 = vrot.slane %v1084, 1
        %v1117 = vrot.slane %v1085, 1
        %v1118 = vrot.slane %v1086, 1
        %v1119 = vrot.slane %v1087, 1
        %v1120 = vrot.slane %v1088, 1
        %v1121 = vrot.slane %v1089, 1
        %v1122 = vrot.slane %v1090, 1
        %v1139 = vadd.f32 %v1059, %v1107
        %v1140 = vadd.f32 %v1060, %v1108
        %v1141 = vadd.f32 %v1061, %v1109
        %v1142 = vadd.f32 %v1062, %v1110
        %v1143 = vadd.f32 %v1063, %v1111
        %v1144 = vadd.f32 %v1064, %v1112
        %v1145 = vadd.f32 %v1065, %v1113
        %v1146 = vadd.f32 %v1066, %v1114
        %v1147 = vadd.f32 %v1067, %v1115
        %v1148 = vadd.f32 %v1068, %v1116
        %v1149 = vadd.f32 %v1069, %v1117
        %v1150 = vadd.f32 %v1070, %v1118
        %v1151 = vadd.f32 %v1071, %v1119
        %v1152 = vadd.f32 %v1072, %v1120
        %v1153 = vadd.f32 %v1073, %v1121
        %v1154 = vadd.f32 %v1074, %v1122
        %v1171 = vrot.slane %v1059, 1
        %v1172 = vrot.slane %v1060, 1
        %v1173 = vrot.slane %v1061, 1
        %v1174 = vrot.slane %v1062, 1
        %v1175 = vrot.slane %v1063, 1
        %v1176 = vrot.slane %v1064, 1
        %v1177 = vrot.slane %v1065, 1
        %v1178 = vrot.slane %v1066, 1
        %v1179 = vrot.slane %v1067, 1
        %v1180 = vrot.slane %v1068, 1
        %v1181 = vrot.slane %v1069, 1
        %v1182 = vrot.slane %v1070, 1
        %v1183 = vrot.slane %v1071, 1
        %v1184 = vrot.slane %v1072, 1
        %v1185 = vrot.slane %v1073, 1
        %v1186 = vrot.slane %v1074, 1
        %v1203 = vadd.f32 %v1075, %v1171
        %v1204 = vadd.f32 %v1076, %v1172
        %v1205 = vadd.f32 %v1077, %v1173
        %v1206 = vadd.f32 %v1078, %v1174
        %v1207 = vadd.f32 %v1079, %v1175
        %v1208 = vadd.f32 %v1080, %v1176
        %v1209 = vadd.f32 %v1081, %v1177
        %v1210 = vadd.f32 %v1082, %v1178
        %v1211 = vadd.f32 %v1083, %v1179
        %v1212 = vadd.f32 %v1084, %v1180
        %v1213 = vadd.f32 %v1085, %v1181
        %v1214 = vadd.f32 %v1086, %v1182
        %v1215 = vadd.f32 %v1087, %v1183
        %v1216 = vadd.f32 %v1088, %v1184
        %v1217 = vadd.f32 %v1089, %v1185
        %v1218 = vadd.f32 %v1090, %v1186
        %v1235 = vrot.slane %v963, 1
        %v1236 = vrot.slane %v964, 1
        %v1237 = vrot.slane %v965, 1
        %v1238 = vrot.slane %v966, 1
        %v1239 = vrot.slane %v967, 1
        %v1240 = vrot.slane %v968, 1
        %v1241 = vrot.slane %v969, 1
        %v1242 = vrot.slane %v970, 1
        %v1243 = vrot.slane %v971, 1
        %v1244 = vrot.slane %v972, 1
        %v1245 = vrot.slane %v973, 1
        %v1246 = vrot.slane %v974, 1
        %v1247 = vrot.slane %v975, 1
        %v1248 = vrot.slane %v976, 1
        %v1249 = vrot.slane %v977, 1
        %v1250 = vrot.slane %v978, 1
        %v1267 = vadd.f32 %v979, %v1235
        %v1268 = vadd.f32 %v980, %v1236
        %v1269 = vadd.f32 %v981, %v1237
        %v1270 = vadd.f32 %v982, %v1238
        %v1271 = vadd.f32 %v983, %v1239
        %v1272 = vadd.f32 %v984, %v1240
        %v1273 = vadd.f32 %v985, %v1241
        %v1274 = vadd.f32 %v986, %v1242
        %v1275 = vadd.f32 %v987, %v1243
        %v1276 = vadd.f32 %v988, %v1244
        %v1277 = vadd.f32 %v989, %v1245
        %v1278 = vadd.f32 %v990, %v1246
        %v1279 = vadd.f32 %v991, %v1247
        %v1280 = vadd.f32 %v992, %v1248
        %v1281 = vadd.f32 %v993, %v1249
        %v1282 = vadd.f32 %v994, %v1250
        %v1299 = vrot.slane %v867, 1
        %v1300 = vrot.slane %v868, 1
        %v1301 = vrot.slane %v869, 1
        %v1302 = vrot.slane %v870, 1
        %v1303 = vrot.slane %v871, 1
        %v1304 = vrot.slane %v872, 1
        %v1305 = vrot.slane %v873, 1
        %v1306 = vrot.slane %v874, 1
        %v1307 = vrot.slane %v875, 1
        %v1308 = vrot.slane %v876, 1
        %v1309 = vrot.slane %v877, 1
        %v1310 = vrot.slane %v878, 1
        %v1311 = vrot.slane %v879, 1
        %v1312 = vrot.slane %v880, 1
        %v1313 = vrot.slane %v881, 1
        %v1314 = vrot.slane %v882, 1
        %v1331 = vadd.f32 %v883, %v1299
        %v1332 = vadd.f32 %v884, %v1300
        %v1333 = vadd.f32 %v885, %v1301
        %v1334 = vadd.f32 %v886, %v1302
        %v1335 = vadd.f32 %v887, %v1303
        %v1336 = vadd.f32 %v888, %v1304
        %v1337 = vadd.f32 %v889, %v1305
        %v1338 = vadd.f32 %v890, %v1306
        %v1339 = vadd.f32 %v891, %v1307
        %v1340 = vadd.f32 %v892, %v1308
        %v1341 = vadd.f32 %v893, %v1309
        %v1342 = vadd.f32 %v894, %v1310
        %v1343 = vadd.f32 %v895, %v1311
        %v1344 = vadd.f32 %v896, %v1312
        %v1345 = vadd.f32 %v897, %v1313
        %v1346 = vadd.f32 %v898, %v1314
        %v1363 = vrot.slane %v771, 1
        %v1364 = vrot.slane %v772, 1
        %v1365 = vrot.slane %v773, 1
        %v1366 = vrot.slane %v774, 1
        %v1367 = vrot.slane %v775, 1
        %v1368 = vrot.slane %v776, 1
        %v1369 = vrot.slane %v777, 1
        %v1370 = vrot.slane %v778, 1
        %v1371 = vrot.slane %v779, 1
        %v1372 = vrot.slane %v780, 1
        %v1373 = vrot.slane %v781, 1
        %v1374 = vrot.slane %v782, 1
        %v1375 = vrot.slane %v783, 1
        %v1376 = vrot.slane %v784, 1
        %v1377 = vrot.slane %v785, 1
        %v1378 = vrot.slane %v786, 1
        %v1395 = vadd.f32 %v787, %v1363
        %v1396 = vadd.f32 %v788, %v1364
        %v1397 = vadd.f32 %v789, %v1365
        %v1398 = vadd.f32 %v790, %v1366
        %v1399 = vadd.f32 %v791, %v1367
        %v1400 = vadd.f32 %v792, %v1368
        %v1401 = vadd.f32 %v793, %v1369
        %v1402 = vadd.f32 %v794, %v1370
        %v1403 = vadd.f32 %v795, %v1371
        %v1404 = vadd.f32 %v796, %v1372
        %v1405 = vadd.f32 %v797, %v1373
        %v1406 = vadd.f32 %v798, %v1374
        %v1407 = vadd.f32 %v799, %v1375
        %v1408 = vadd.f32 %v800, %v1376
        %v1409 = vadd.f32 %v801, %v1377
        %v1410 = vadd.f32 %v802, %v1378
        %v1427 = vrot.slane %v675, 1
        %v1428 = vrot.slane %v676, 1
        %v1429 = vrot.slane %v677, 1
        %v1430 = vrot.slane %v678, 1
        %v1431 = vrot.slane %v679, 1
        %v1432 = vrot.slane %v680, 1
        %v1433 = vrot.slane %v681, 1
        %v1434 = vrot.slane %v682, 1
        %v1435 = vrot.slane %v683, 1
        %v1436 = vrot.slane %v684, 1
        %v1437 = vrot.slane %v685, 1
        %v1438 = vrot.slane %v686, 1
        %v1439 = vrot.slane %v687, 1
        %v1440 = vrot.slane %v688, 1
        %v1441 = vrot.slane %v689, 1
        %v1442 = vrot.slane %v690, 1
        %v1459 = vadd.f32 %v691, %v1427
        %v1460 = vadd.f32 %v692, %v1428
        %v1461 = vadd.f32 %v693, %v1429
        %v1462 = vadd.f32 %v694, %v1430
        %v1463 = vadd.f32 %v695, %v1431
        %v1464 = vadd.f32 %v696, %v1432
        %v1465 = vadd.f32 %v697, %v1433
        %v1466 = vadd.f32 %v698, %v1434
        %v1467 = vadd.f32 %v699, %v1435
        %v1468 = vadd.f32 %v700, %v1436
        %v1469 = vadd.f32 %v701, %v1437
        %v1470 = vadd.f32 %v702, %v1438
        %v1471 = vadd.f32 %v703, %v1439
        %v1472 = vadd.f32 %v704, %v1440
        %v1473 = vadd.f32 %v705, %v1441
        %v1474 = vadd.f32 %v706, %v1442
        %v1491 = vrot.slane %v579, 1
        %v1492 = vrot.slane %v580, 1
        %v1493 = vrot.slane %v581, 1
        %v1494 = vrot.slane %v582, 1
        %v1495 = vrot.slane %v583, 1
        %v1496 = vrot.slane %v584, 1
        %v1497 = vrot.slane %v585, 1
        %v1498 = vrot.slane %v586, 1
        %v1499 = vrot.slane %v587, 1
        %v1500 = vrot.slane %v588, 1
        %v1501 = vrot.slane %v589, 1
        %v1502 = vrot.slane %v590, 1
        %v1503 = vrot.slane %v591, 1
        %v1504 = vrot.slane %v592, 1
        %v1505 = vrot.slane %v593, 1
        %v1506 = vrot.slane %v594, 1
        %v1523 = vadd.f32 %v595, %v1491
        %v1524 = vadd.f32 %v596, %v1492
        %v1525 = vadd.f32 %v597, %v1493
        %v1526 = vadd.f32 %v598, %v1494
        %v1527 = vadd.f32 %v599, %v1495
        %v1528 = vadd.f32 %v600, %v1496
        %v1529 = vadd.f32 %v601, %v1497
        %v1530 = vadd.f32 %v602, %v1498
        %v1531 = vadd.f32 %v603, %v1499
        %v1532 = vadd.f32 %v604, %v1500
        %v1533 = vadd.f32 %v605, %v1501
        %v1534 = vadd.f32 %v606, %v1502
        %v1535 = vadd.f32 %v607, %v1503
        %v1536 = vadd.f32 %v608, %v1504
        %v1537 = vadd.f32 %v609, %v1505
        %v1538 = vadd.f32 %v610, %v1506
        %v1555 = vrot.slane %v483, 1
        %v1556 = vrot.slane %v484, 1
        %v1557 = vrot.slane %v485, 1
        %v1558 = vrot.slane %v486, 1
        %v1559 = vrot.slane %v487, 1
        %v1560 = vrot.slane %v488, 1
        %v1561 = vrot.slane %v489, 1
        %v1562 = vrot.slane %v490, 1
        %v1563 = vrot.slane %v491, 1
        %v1564 = vrot.slane %v492, 1
        %v1565 = vrot.slane %v493, 1
        %v1566 = vrot.slane %v494, 1
        %v1567 = vrot.slane %v495, 1
        %v1568 = vrot.slane %v496, 1
        %v1569 = vrot.slane %v497, 1
        %v1570 = vrot.slane %v498, 1
        %v1587 = vadd.f32 %v499, %v1555
        %v1588 = vadd.f32 %v500, %v1556
        %v1589 = vadd.f32 %v501, %v1557
        %v1590 = vadd.f32 %v502, %v1558
        %v1591 = vadd.f32 %v503, %v1559
        %v1592 = vadd.f32 %v504, %v1560
        %v1593 = vadd.f32 %v505, %v1561
        %v1594 = vadd.f32 %v506, %v1562
        %v1595 = vadd.f32 %v507, %v1563
        %v1596 = vadd.f32 %v508, %v1564
        %v1597 = vadd.f32 %v509, %v1565
        %v1598 = vadd.f32 %v510, %v1566
        %v1599 = vadd.f32 %v511, %v1567
        %v1600 = vadd.f32 %v512, %v1568
        %v1601 = vadd.f32 %v513, %v1569
        %v1602 = vadd.f32 %v514, %v1570
        %v1603 = vadd.f32 %v358, %v403
        %v1604 = vadd.f32 %v361, %v404
        %v1605 = vadd.f32 %v364, %v405
        %v1606 = vadd.f32 %v367, %v406
        %v1607 = vadd.f32 %v370, %v407
        %v1608 = vadd.f32 %v373, %v408
        %v1609 = vadd.f32 %v376, %v409
        %v1610 = vadd.f32 %v379, %v410
        %v1611 = vadd.f32 %v382, %v411
        %v1612 = vadd.f32 %v385, %v412
        %v1613 = vadd.f32 %v388, %v413
        %v1614 = vadd.f32 %v391, %v414
        %v1615 = vadd.f32 %v394, %v415
        %v1616 = vadd.f32 %v397, %v416
        %v1617 = vadd.f32 %v400, %v417
        %v1618 = vadd.f32 %v402, %v418
        %v1635 = vrot.slane %v563, 7
        %v1636 = vrot.slane %v564, 7
        %v1637 = vrot.slane %v565, 7
        %v1638 = vrot.slane %v566, 7
        %v1639 = vrot.slane %v567, 7
        %v1640 = vrot.slane %v568, 7
        %v1641 = vrot.slane %v569, 7
        %v1642 = vrot.slane %v570, 7
        %v1643 = vrot.slane %v571, 7
        %v1644 = vrot.slane %v572, 7
        %v1645 = vrot.slane %v573, 7
        %v1646 = vrot.slane %v574, 7
        %v1647 = vrot.slane %v575, 7
        %v1648 = vrot.slane %v576, 7
        %v1649 = vrot.slane %v577, 7
        %v1650 = vrot.slane %v578, 7
        %v1683 = vrot.slane %v659, 6
        %v1684 = vrot.slane %v660, 6
        %v1685 = vrot.slane %v661, 6
        %v1686 = vrot.slane %v662, 6
        %v1687 = vrot.slane %v663, 6
        %v1688 = vrot.slane %v664, 6
        %v1689 = vrot.slane %v665, 6
        %v1690 = vrot.slane %v666, 6
        %v1691 = vrot.slane %v667, 6
        %v1692 = vrot.slane %v668, 6
        %v1693 = vrot.slane %v669, 6
        %v1694 = vrot.slane %v670, 6
        %v1695 = vrot.slane %v671, 6
        %v1696 = vrot.slane %v672, 6
        %v1697 = vrot.slane %v673, 6
        %v1698 = vrot.slane %v674, 6
        %v1731 = vrot.slane %v755, 6
        %v1732 = vrot.slane %v756, 6
        %v1733 = vrot.slane %v757, 6
        %v1734 = vrot.slane %v758, 6
        %v1735 = vrot.slane %v759, 6
        %v1736 = vrot.slane %v760, 6
        %v1737 = vrot.slane %v761, 6
        %v1738 = vrot.slane %v762, 6
        %v1739 = vrot.slane %v763, 6
        %v1740 = vrot.slane %v764, 6
        %v1741 = vrot.slane %v765, 6
        %v1742 = vrot.slane %v766, 6
        %v1743 = vrot.slane %v767, 6
        %v1744 = vrot.slane %v768, 6
        %v1745 = vrot.slane %v769, 6
        %v1746 = vrot.slane %v770, 6
        %v1779 = vrot.slane %v851, 5
        %v1780 = vrot.slane %v852, 5
        %v1781 = vrot.slane %v853, 5
        %v1782 = vrot.slane %v854, 5
        %v1783 = vrot.slane %v855, 5
        %v1784 = vrot.slane %v856, 5
        %v1785 = vrot.slane %v857, 5
        %v1786 = vrot.slane %v858, 5
        %v1787 = vrot.slane %v859, 5
        %v1788 = vrot.slane %v860, 5
        %v1789 = vrot.slane %v861, 5
        %v1790 = vrot.slane %v862, 5
        %v1791 = vrot.slane %v863, 5
        %v1792 = vrot.slane %v864, 5
        %v1793 = vrot.slane %v865, 5
        %v1794 = vrot.slane %v866, 5
        %v1827 = vrot.slane %v947, 5
        %v1828 = vrot.slane %v948, 5
        %v1829 = vrot.slane %v949, 5
        %v1830 = vrot.slane %v950, 5
        %v1831 = vrot.slane %v951, 5
        %v1832 = vrot.slane %v952, 5
        %v1833 = vrot.slane %v953, 5
        %v1834 = vrot.slane %v954, 5
        %v1835 = vrot.slane %v955, 5
        %v1836 = vrot.slane %v956, 5
        %v1837 = vrot.slane %v957, 5
        %v1838 = vrot.slane %v958, 5
        %v1839 = vrot.slane %v959, 5
        %v1840 = vrot.slane %v960, 5
        %v1841 = vrot.slane %v961, 5
        %v1842 = vrot.slane %v962, 5
        %v1875 = vrot.slane %v1043, 4
        %v1876 = vrot.slane %v1044, 4
        %v1877 = vrot.slane %v1045, 4
        %v1878 = vrot.slane %v1046, 4
        %v1879 = vrot.slane %v1047, 4
        %v1880 = vrot.slane %v1048, 4
        %v1881 = vrot.slane %v1049, 4
        %v1882 = vrot.slane %v1050, 4
        %v1883 = vrot.slane %v1051, 4
        %v1884 = vrot.slane %v1052, 4
        %v1885 = vrot.slane %v1053, 4
        %v1886 = vrot.slane %v1054, 4
        %v1887 = vrot.slane %v1055, 4
        %v1888 = vrot.slane %v1056, 4
        %v1889 = vrot.slane %v1057, 4
        %v1890 = vrot.slane %v1058, 4
        %v1923 = vrot.slane %v1139, 4
        %v1924 = vrot.slane %v1140, 4
        %v1925 = vrot.slane %v1141, 4
        %v1926 = vrot.slane %v1142, 4
        %v1927 = vrot.slane %v1143, 4
        %v1928 = vrot.slane %v1144, 4
        %v1929 = vrot.slane %v1145, 4
        %v1930 = vrot.slane %v1146, 4
        %v1931 = vrot.slane %v1147, 4
        %v1932 = vrot.slane %v1148, 4
        %v1933 = vrot.slane %v1149, 4
        %v1934 = vrot.slane %v1150, 4
        %v1935 = vrot.slane %v1151, 4
        %v1936 = vrot.slane %v1152, 4
        %v1937 = vrot.slane %v1153, 4
        %v1938 = vrot.slane %v1154, 4
        %v1971 = vrot.slane %v1203, 3
        %v1972 = vrot.slane %v1204, 3
        %v1973 = vrot.slane %v1205, 3
        %v1974 = vrot.slane %v1206, 3
        %v1975 = vrot.slane %v1207, 3
        %v1976 = vrot.slane %v1208, 3
        %v1977 = vrot.slane %v1209, 3
        %v1978 = vrot.slane %v1210, 3
        %v1979 = vrot.slane %v1211, 3
        %v1980 = vrot.slane %v1212, 3
        %v1981 = vrot.slane %v1213, 3
        %v1982 = vrot.slane %v1214, 3
        %v1983 = vrot.slane %v1215, 3
        %v1984 = vrot.slane %v1216, 3
        %v1985 = vrot.slane %v1217, 3
        %v1986 = vrot.slane %v1218, 3
        %v2019 = vrot.slane %v1267, 3
        %v2020 = vrot.slane %v1268, 3
        %v2021 = vrot.slane %v1269, 3
        %v2022 = vrot.slane %v1270, 3
        %v2023 = vrot.slane %v1271, 3
        %v2024 = vrot.slane %v1272, 3
        %v2025 = vrot.slane %v1273, 3
        %v2026 = vrot.slane %v1274, 3
        %v2027 = vrot.slane %v1275, 3
        %v2028 = vrot.slane %v1276, 3
        %v2029 = vrot.slane %v1277, 3
        %v2030 = vrot.slane %v1278, 3
        %v2031 = vrot.slane %v1279, 3
        %v2032 = vrot.slane %v1280, 3
        %v2033 = vrot.slane %v1281, 3
        %v2034 = vrot.slane %v1282, 3
        %v2067 = vrot.slane %v1331, 2
        %v2068 = vrot.slane %v1332, 2
        %v2069 = vrot.slane %v1333, 2
        %v2070 = vrot.slane %v1334, 2
        %v2071 = vrot.slane %v1335, 2
        %v2072 = vrot.slane %v1336, 2
        %v2073 = vrot.slane %v1337, 2
        %v2074 = vrot.slane %v1338, 2
        %v2075 = vrot.slane %v1339, 2
        %v2076 = vrot.slane %v1340, 2
        %v2077 = vrot.slane %v1341, 2
        %v2078 = vrot.slane %v1342, 2
        %v2079 = vrot.slane %v1343, 2
        %v2080 = vrot.slane %v1344, 2
        %v2081 = vrot.slane %v1345, 2
        %v2082 = vrot.slane %v1346, 2
        %v2115 = vrot.slane %v1395, 2
        %v2116 = vrot.slane %v1396, 2
        %v2117 = vrot.slane %v1397, 2
        %v2118 = vrot.slane %v1398, 2
        %v2119 = vrot.slane %v1399, 2
        %v2120 = vrot.slane %v1400, 2
        %v2121 = vrot.slane %v1401, 2
        %v2122 = vrot.slane %v1402, 2
        %v2123 = vrot.slane %v1403, 2
        %v2124 = vrot.slane %v1404, 2
        %v2125 = vrot.slane %v1405, 2
        %v2126 = vrot.slane %v1406, 2
        %v2127 = vrot.slane %v1407, 2
        %v2128 = vrot.slane %v1408, 2
        %v2129 = vrot.slane %v1409, 2
        %v2130 = vrot.slane %v1410, 2
        %v2163 = vrot.slane %v1459, 1
        %v2164 = vrot.slane %v1460, 1
        %v2165 = vrot.slane %v1461, 1
        %v2166 = vrot.slane %v1462, 1
        %v2167 = vrot.slane %v1463, 1
        %v2168 = vrot.slane %v1464, 1
        %v2169 = vrot.slane %v1465, 1
        %v2170 = vrot.slane %v1466, 1
        %v2171 = vrot.slane %v1467, 1
        %v2172 = vrot.slane %v1468, 1
        %v2173 = vrot.slane %v1469, 1
        %v2174 = vrot.slane %v1470, 1
        %v2175 = vrot.slane %v1471, 1
        %v2176 = vrot.slane %v1472, 1
        %v2177 = vrot.slane %v1473, 1
        %v2178 = vrot.slane %v1474, 1
        %v2211 = vrot.slane %v1523, 1
        %v2212 = vrot.slane %v1524, 1
        %v2213 = vrot.slane %v1525, 1
        %v2214 = vrot.slane %v1526, 1
        %v2215 = vrot.slane %v1527, 1
        %v2216 = vrot.slane %v1528, 1
        %v2217 = vrot.slane %v1529, 1
        %v2218 = vrot.slane %v1530, 1
        %v2219 = vrot.slane %v1531, 1
        %v2220 = vrot.slane %v1532, 1
        %v2221 = vrot.slane %v1533, 1
        %v2222 = vrot.slane %v1534, 1
        %v2223 = vrot.slane %v1535, 1
        %v2224 = vrot.slane %v1536, 1
        %v2225 = vrot.slane %v1537, 1
        %v2226 = vrot.slane %v1538, 1
        %vm2243 = vcmask 1040384
        %v2244 = vsel %vm2243, %v467, %v1635
        %v2245 = vsel %vm2243, %v468, %v1636
        %v2246 = vsel %vm2243, %v469, %v1637
        %v2247 = vsel %vm2243, %v470, %v1638
        %v2248 = vsel %vm2243, %v471, %v1639
        %v2249 = vsel %vm2243, %v472, %v1640
        %v2250 = vsel %vm2243, %v473, %v1641
        %v2251 = vsel %vm2243, %v474, %v1642
        %v2252 = vsel %vm2243, %v475, %v1643
        %v2253 = vsel %vm2243, %v476, %v1644
        %v2254 = vsel %vm2243, %v477, %v1645
        %v2255 = vsel %vm2243, %v478, %v1646
        %v2256 = vsel %vm2243, %v479, %v1647
        %v2257 = vsel %vm2243, %v480, %v1648
        %v2258 = vsel %vm2243, %v481, %v1649
        %v2259 = vsel %vm2243, %v482, %v1650
        %vm2260 = vcmask 1041408
        %v2261 = vsel %vm2260, %v2244, %v1683
        %v2262 = vsel %vm2260, %v2245, %v1684
        %v2263 = vsel %vm2260, %v2246, %v1685
        %v2264 = vsel %vm2260, %v2247, %v1686
        %v2265 = vsel %vm2260, %v2248, %v1687
        %v2266 = vsel %vm2260, %v2249, %v1688
        %v2267 = vsel %vm2260, %v2250, %v1689
        %v2268 = vsel %vm2260, %v2251, %v1690
        %v2269 = vsel %vm2260, %v2252, %v1691
        %v2270 = vsel %vm2260, %v2253, %v1692
        %v2271 = vsel %vm2260, %v2254, %v1693
        %v2272 = vsel %vm2260, %v2255, %v1694
        %v2273 = vsel %vm2260, %v2256, %v1695
        %v2274 = vsel %vm2260, %v2257, %v1696
        %v2275 = vsel %vm2260, %v2258, %v1697
        %v2276 = vsel %vm2260, %v2259, %v1698
        %vm2277 = vcmask 1042432
        %v2278 = vsel %vm2277, %v2261, %v1731
        %v2279 = vsel %vm2277, %v2262, %v1732
        %v2280 = vsel %vm2277, %v2263, %v1733
        %v2281 = vsel %vm2277, %v2264, %v1734
        %v2282 = vsel %vm2277, %v2265, %v1735
        %v2283 = vsel %vm2277, %v2266, %v1736
        %v2284 = vsel %vm2277, %v2267, %v1737
        %v2285 = vsel %vm2277, %v2268, %v1738
        %v2286 = vsel %vm2277, %v2269, %v1739
        %v2287 = vsel %vm2277, %v2270, %v1740
        %v2288 = vsel %vm2277, %v2271, %v1741
        %v2289 = vsel %vm2277, %v2272, %v1742
        %v2290 = vsel %vm2277, %v2273, %v1743
        %v2291 = vsel %vm2277, %v2274, %v1744
        %v2292 = vsel %vm2277, %v2275, %v1745
        %v2293 = vsel %vm2277, %v2276, %v1746
        %vm2294 = vcmask 1043456
        %v2295 = vsel %vm2294, %v2278, %v1779
        %v2296 = vsel %vm2294, %v2279, %v1780
        %v2297 = vsel %vm2294, %v2280, %v1781
        %v2298 = vsel %vm2294, %v2281, %v1782
        %v2299 = vsel %vm2294, %v2282, %v1783
        %v2300 = vsel %vm2294, %v2283, %v1784
        %v2301 = vsel %vm2294, %v2284, %v1785
        %v2302 = vsel %vm2294, %v2285, %v1786
        %v2303 = vsel %vm2294, %v2286, %v1787
        %v2304 = vsel %vm2294, %v2287, %v1788
        %v2305 = vsel %vm2294, %v2288, %v1789
        %v2306 = vsel %vm2294, %v2289, %v1790
        %v2307 = vsel %vm2294, %v2290, %v1791
        %v2308 = vsel %vm2294, %v2291, %v1792
        %v2309 = vsel %vm2294, %v2292, %v1793
        %v2310 = vsel %vm2294, %v2293, %v1794
        %vm2311 = vcmask 1044480
        %v2312 = vsel %vm2311, %v2295, %v1827
        %v2313 = vsel %vm2311, %v2296, %v1828
        %v2314 = vsel %vm2311, %v2297, %v1829
        %v2315 = vsel %vm2311, %v2298, %v1830
        %v2316 = vsel %vm2311, %v2299, %v1831
        %v2317 = vsel %vm2311, %v2300, %v1832
        %v2318 = vsel %vm2311, %v2301, %v1833
        %v2319 = vsel %vm2311, %v2302, %v1834
        %v2320 = vsel %vm2311, %v2303, %v1835
        %v2321 = vsel %vm2311, %v2304, %v1836
        %v2322 = vsel %vm2311, %v2305, %v1837
        %v2323 = vsel %vm2311, %v2306, %v1838
        %v2324 = vsel %vm2311, %v2307, %v1839
        %v2325 = vsel %vm2311, %v2308, %v1840
        %v2326 = vsel %vm2311, %v2309, %v1841
        %v2327 = vsel %vm2311, %v2310, %v1842
        %vm2328 = vcmask 1045504
        %v2329 = vsel %vm2328, %v2312, %v1875
        %v2330 = vsel %vm2328, %v2313, %v1876
        %v2331 = vsel %vm2328, %v2314, %v1877
        %v2332 = vsel %vm2328, %v2315, %v1878
        %v2333 = vsel %vm2328, %v2316, %v1879
        %v2334 = vsel %vm2328, %v2317, %v1880
        %v2335 = vsel %vm2328, %v2318, %v1881
        %v2336 = vsel %vm2328, %v2319, %v1882
        %v2337 = vsel %vm2328, %v2320, %v1883
        %v2338 = vsel %vm2328, %v2321, %v1884
        %v2339 = vsel %vm2328, %v2322, %v1885
        %v2340 = vsel %vm2328, %v2323, %v1886
        %v2341 = vsel %vm2328, %v2324, %v1887
        %v2342 = vsel %vm2328, %v2325, %v1888
        %v2343 = vsel %vm2328, %v2326, %v1889
        %v2344 = vsel %vm2328, %v2327, %v1890
        %vm2345 = vcmask 1046528
        %v2346 = vsel %vm2345, %v2329, %v1923
        %v2347 = vsel %vm2345, %v2330, %v1924
        %v2348 = vsel %vm2345, %v2331, %v1925
        %v2349 = vsel %vm2345, %v2332, %v1926
        %v2350 = vsel %vm2345, %v2333, %v1927
        %v2351 = vsel %vm2345, %v2334, %v1928
        %v2352 = vsel %vm2345, %v2335, %v1929
        %v2353 = vsel %vm2345, %v2336, %v1930
        %v2354 = vsel %vm2345, %v2337, %v1931
        %v2355 = vsel %vm2345, %v2338, %v1932
        %v2356 = vsel %vm2345, %v2339, %v1933
        %v2357 = vsel %vm2345, %v2340, %v1934
        %v2358 = vsel %vm2345, %v2341, %v1935
        %v2359 = vsel %vm2345, %v2342, %v1936
        %v2360 = vsel %vm2345, %v2343, %v1937
        %v2361 = vsel %vm2345, %v2344, %v1938
        %v2362 = vsel %vm2243, %v1971, %v2019
        %v2363 = vsel %vm2243, %v1972, %v2020
        %v2364 = vsel %vm2243, %v1973, %v2021
        %v2365 = vsel %vm2243, %v1974, %v2022
        %v2366 = vsel %vm2243, %v1975, %v2023
        %v2367 = vsel %vm2243, %v1976, %v2024
        %v2368 = vsel %vm2243, %v1977, %v2025
        %v2369 = vsel %vm2243, %v1978, %v2026
        %v2370 = vsel %vm2243, %v1979, %v2027
        %v2371 = vsel %vm2243, %v1980, %v2028
        %v2372 = vsel %vm2243, %v1981, %v2029
        %v2373 = vsel %vm2243, %v1982, %v2030
        %v2374 = vsel %vm2243, %v1983, %v2031
        %v2375 = vsel %vm2243, %v1984, %v2032
        %v2376 = vsel %vm2243, %v1985, %v2033
        %v2377 = vsel %vm2243, %v1986, %v2034
        %v2378 = vsel %vm2260, %v2362, %v2067
        %v2379 = vsel %vm2260, %v2363, %v2068
        %v2380 = vsel %vm2260, %v2364, %v2069
        %v2381 = vsel %vm2260, %v2365, %v2070
        %v2382 = vsel %vm2260, %v2366, %v2071
        %v2383 = vsel %vm2260, %v2367, %v2072
        %v2384 = vsel %vm2260, %v2368, %v2073
        %v2385 = vsel %vm2260, %v2369, %v2074
        %v2386 = vsel %vm2260, %v2370, %v2075
        %v2387 = vsel %vm2260, %v2371, %v2076
        %v2388 = vsel %vm2260, %v2372, %v2077
        %v2389 = vsel %vm2260, %v2373, %v2078
        %v2390 = vsel %vm2260, %v2374, %v2079
        %v2391 = vsel %vm2260, %v2375, %v2080
        %v2392 = vsel %vm2260, %v2376, %v2081
        %v2393 = vsel %vm2260, %v2377, %v2082
        %v2394 = vsel %vm2277, %v2378, %v2115
        %v2395 = vsel %vm2277, %v2379, %v2116
        %v2396 = vsel %vm2277, %v2380, %v2117
        %v2397 = vsel %vm2277, %v2381, %v2118
        %v2398 = vsel %vm2277, %v2382, %v2119
        %v2399 = vsel %vm2277, %v2383, %v2120
        %v2400 = vsel %vm2277, %v2384, %v2121
        %v2401 = vsel %vm2277, %v2385, %v2122
        %v2402 = vsel %vm2277, %v2386, %v2123
        %v2403 = vsel %vm2277, %v2387, %v2124
        %v2404 = vsel %vm2277, %v2388, %v2125
        %v2405 = vsel %vm2277, %v2389, %v2126
        %v2406 = vsel %vm2277, %v2390, %v2127
        %v2407 = vsel %vm2277, %v2391, %v2128
        %v2408 = vsel %vm2277, %v2392, %v2129
        %v2409 = vsel %vm2277, %v2393, %v2130
        %v2410 = vsel %vm2294, %v2394, %v2163
        %v2411 = vsel %vm2294, %v2395, %v2164
        %v2412 = vsel %vm2294, %v2396, %v2165
        %v2413 = vsel %vm2294, %v2397, %v2166
        %v2414 = vsel %vm2294, %v2398, %v2167
        %v2415 = vsel %vm2294, %v2399, %v2168
        %v2416 = vsel %vm2294, %v2400, %v2169
        %v2417 = vsel %vm2294, %v2401, %v2170
        %v2418 = vsel %vm2294, %v2402, %v2171
        %v2419 = vsel %vm2294, %v2403, %v2172
        %v2420 = vsel %vm2294, %v2404, %v2173
        %v2421 = vsel %vm2294, %v2405, %v2174
        %v2422 = vsel %vm2294, %v2406, %v2175
        %v2423 = vsel %vm2294, %v2407, %v2176
        %v2424 = vsel %vm2294, %v2408, %v2177
        %v2425 = vsel %vm2294, %v2409, %v2178
        %v2426 = vsel %vm2311, %v2410, %v2211
        %v2427 = vsel %vm2311, %v2411, %v2212
        %v2428 = vsel %vm2311, %v2412, %v2213
        %v2429 = vsel %vm2311, %v2413, %v2214
        %v2430 = vsel %vm2311, %v2414, %v2215
        %v2431 = vsel %vm2311, %v2415, %v2216
        %v2432 = vsel %vm2311, %v2416, %v2217
        %v2433 = vsel %vm2311, %v2417, %v2218
        %v2434 = vsel %vm2311, %v2418, %v2219
        %v2435 = vsel %vm2311, %v2419, %v2220
        %v2436 = vsel %vm2311, %v2420, %v2221
        %v2437 = vsel %vm2311, %v2421, %v2222
        %v2438 = vsel %vm2311, %v2422, %v2223
        %v2439 = vsel %vm2311, %v2423, %v2224
        %v2440 = vsel %vm2311, %v2424, %v2225
        %v2441 = vsel %vm2311, %v2425, %v2226
        %v2442 = vsel %vm2328, %v2426, %v1587
        %v2443 = vsel %vm2328, %v2427, %v1588
        %v2444 = vsel %vm2328, %v2428, %v1589
        %v2445 = vsel %vm2328, %v2429, %v1590
        %v2446 = vsel %vm2328, %v2430, %v1591
        %v2447 = vsel %vm2328, %v2431, %v1592
        %v2448 = vsel %vm2328, %v2432, %v1593
        %v2449 = vsel %vm2328, %v2433, %v1594
        %v2450 = vsel %vm2328, %v2434, %v1595
        %v2451 = vsel %vm2328, %v2435, %v1596
        %v2452 = vsel %vm2328, %v2436, %v1597
        %v2453 = vsel %vm2328, %v2437, %v1598
        %v2454 = vsel %vm2328, %v2438, %v1599
        %v2455 = vsel %vm2328, %v2439, %v1600
        %v2456 = vsel %vm2328, %v2440, %v1601
        %v2457 = vsel %vm2328, %v2441, %v1602
        %v2458 = vsel %vm2345, %v2442, %v1603
        %v2459 = vsel %vm2345, %v2443, %v1604
        %v2460 = vsel %vm2345, %v2444, %v1605
        %v2461 = vsel %vm2345, %v2445, %v1606
        %v2462 = vsel %vm2345, %v2446, %v1607
        %v2463 = vsel %vm2345, %v2447, %v1608
        %v2464 = vsel %vm2345, %v2448, %v1609
        %v2465 = vsel %vm2345, %v2449, %v1610
        %v2466 = vsel %vm2345, %v2450, %v1611
        %v2467 = vsel %vm2345, %v2451, %v1612
        %v2468 = vsel %vm2345, %v2452, %v1613
        %v2469 = vsel %vm2345, %v2453, %v1614
        %v2470 = vsel %vm2345, %v2454, %v1615
        %v2471 = vsel %vm2345, %v2455, %v1616
        %v2472 = vsel %vm2345, %v2456, %v1617
        %v2473 = vsel %vm2345, %v2457, %v1618
        %2474 = vst.msk [vmem:[%s203] sm:$0xff] %vm227, %v2346
        %2475 = vst.msk [vmem:[%s203 + $0x8] sm:$0xff] %vm227, %v2458
        %2476 = vst.msk [vmem:[%s203 + $0x10] sm:$0xff] %vm227, %v2347
        %2477 = vst.msk [vmem:[%s203 + $0x18] sm:$0xff] %vm227, %v2459
        %2478 = vst.msk [vmem:[%s203 + $0x20] sm:$0xff] %vm227, %v2348
        %2479 = vst.msk [vmem:[%s203 + $0x28] sm:$0xff] %vm227, %v2460
        %2480 = vst.msk [vmem:[%s203 + $0x30] sm:$0xff] %vm227, %v2349
        %2481 = vst.msk [vmem:[%s203 + $0x38] sm:$0xff] %vm227, %v2461
        %2482 = vst.msk [vmem:[%s203 + $0x40] sm:$0xff] %vm227, %v2350
        %2483 = vst.msk [vmem:[%s203 + $0x48] sm:$0xff] %vm227, %v2462
        %2484 = vst.msk [vmem:[%s203 + $0x50] sm:$0xff] %vm227, %v2351
        %2485 = vst.msk [vmem:[%s203 + $0x58] sm:$0xff] %vm227, %v2463
        %2486 = vst.msk [vmem:[%s203 + $0x60] sm:$0xff] %vm227, %v2352
        %2487 = vst.msk [vmem:[%s203 + $0x68] sm:$0xff] %vm227, %v2464
        %2488 = vst.msk [vmem:[%s203 + $0x70] sm:$0xff] %vm227, %v2353
        %2489 = vst.msk [vmem:[%s203 + $0x78] sm:$0xff] %vm227, %v2465
        %2490 = vst.msk [vmem:[%s203 + $0x80] sm:$0xff] %vm227, %v2354
        %2491 = vst.msk [vmem:[%s203 + $0x88] sm:$0xff] %vm227, %v2466
        %2492 = vst.msk [vmem:[%s203 + $0x90] sm:$0xff] %vm227, %v2355
        %2493 = vst.msk [vmem:[%s203 + $0x98] sm:$0xff] %vm227, %v2467
        %2494 = vst.msk [vmem:[%s203 + $0xa0] sm:$0xff] %vm227, %v2356
        %2495 = vst.msk [vmem:[%s203 + $0xa8] sm:$0xff] %vm227, %v2468
        %2496 = vst.msk [vmem:[%s203 + $0xb0] sm:$0xff] %vm227, %v2357
        %2497 = vst.msk [vmem:[%s203 + $0xb8] sm:$0xff] %vm227, %v2469
        %2498 = vst.msk [vmem:[%s203 + $0xc0] sm:$0xff] %vm227, %v2358
        %2499 = vst.msk [vmem:[%s203 + $0xc8] sm:$0xff] %vm227, %v2470
        %2500 = vst.msk [vmem:[%s203 + $0xd0] sm:$0xff] %vm227, %v2359
        %2501 = vst.msk [vmem:[%s203 + $0xd8] sm:$0xff] %vm227, %v2471
        %2502 = vst.msk [vmem:[%s203 + $0xe0] sm:$0xff] %vm227, %v2360
        %2503 = vst.msk [vmem:[%s203 + $0xe8] sm:$0xff] %vm227, %v2472
        %2504 = vst.msk [vmem:[%s203 + $0xf0] sm:$0xff] %vm227, %v2361
        %2505 = vst.msk [vmem:[%s203 + $0xf8] sm:$0xff] %vm227, %v2473
        %s2506 = sand.u32 %s97, 1
        %s2507 = scalar_lea.sflag [#allocation4], %s2506
        %s2508 = sand.u32 %s97, 1
        %s2509 = smul.addr %s2508, 256
        %s2510 = scalar_lea.vmem [#allocation7], %s2509
        // Predicated region
        $region41: #{tpu_custom_call.1} parent=31 // pred_check
          %p2511 = pneg %p107
        $region42: #{tpu_custom_call.1} parent=31 // pred_check_branch
          %2513 = sbr.rel (%p2511) target = $region44
        $region43: #{tpu_custom_call.1} parent=31 // pred_region
          %s2515 = ssub.s32 4096, 4096
          %2516 = vsyncadd %s2507, %s2515
          %s2517 = smul.addr %s21, 32
          %s2518 = smul.addr %s2517, 128
          %s2519 = scalar_lea.hbm %s3, %s2518
          %s2520 = sshll.u32 %s2510, 4
          %s2521 = int_to_ptr.vmem [resolvable:$true] %s2520
          %2526 = dma.vmem_to_hbm [thread:$0]  %s2521, 4096, %s2519, %s2507, 128, 128, 8
        $region44: #{tpu_custom_call.1} parent=31 // pred_fallthru
          _
      $region32: #{tpu_custom_call.1} parent=5 // pred_fallthru
        _
      %p2527 = scmp.le.s32.totalorder 2, %s16
      // Predicated region
      $region45: #{tpu_custom_call.1} parent=5 // pred_check
        %p2528 = pneg %p2527
      $region46: #{tpu_custom_call.1} parent=5 // pred_check_branch
        %2530 = sbr.rel (%p2528) target = $region48
      $region47: #{tpu_custom_call.1} parent=5 // pred_region
        %s2531 = ssub.s32 %s16, 2
        // Predicated region
        $region49: #{tpu_custom_call.1} parent=47 // pred_check
          %p2532 = pneg %p113
        $region50: #{tpu_custom_call.1} parent=47 // pred_check_branch
          %2534 = sbr.rel (%p2532) target = $region52
        $region51: #{tpu_custom_call.1} parent=47 // pred_region
          %s2535 = sand.u32 %s98, 1
          %s2536 = scalar_lea.sflag [#allocation4], %s2535
          %s2537 = sand.u32 %s98, 1
          %s2538 = smul.addr %s2537, 256
          %s2539 = scalar_lea.vmem [#allocation7], %s2538
          %2540 = dma.done %s2536, 4096
        $region52: #{tpu_custom_call.1} parent=47 // pred_fallthru
          _
      $region48: #{tpu_custom_call.1} parent=5 // pred_fallthru
        _
    $region6: #{tpu_custom_call.1} parent=1 // loop_footer
      %s20 = sadd.s32 1, %s16
    $region7: #{tpu_custom_call.1} parent=1 // loop_footer_branch
      %15 = sbr.rel target = $region3
    $region8: #{tpu_custom_call.1} parent=1 // loop_exit
      _
    %2541 = vsyncpa [#allocation3], 1
    %s2542 = scalar_lea.sflag [#allocation3], 1
    %2543 = vsyncpa %s2542, 1
    %2544 = vsyncpa [#allocation6], 1
    %2545 = vsyncpa [#allocation4], 1
    %s2546 = scalar_lea.sflag [#allocation4], 1
    %2547 = vsyncpa %s2546, 1

</llo_original>
